<compile_context>
chip_gen: v7x
topology: tpu7x:2x2x1
jax: 0.10.0
libtpu: 0.0.40
codegen_flags: <defaults>
</compile_context>

<pallas_src>
import functools

import jax
import jax.numpy as jnp
from jax import lax
from jax.experimental import pallas as pl
from jax.experimental.pallas import tpu as pltpu


def _nonlocal_kernel(x_ref, wt_ref, bt_ref, wpg_ref, bpg_ref, wo_ref, shift_ref,
                     o_ref, phiT_s, g_s, *, H, W, Cip, TQ):
    Hp, Wp = H // 2, W // 2
    HW = H * W
    HWp = Hp * Wp
    q = pl.program_id(1)

    # ---- once per batch element: merged phi/g 1x1 conv + 2x2 max-pool -------
    @pl.when(q == 0)
    def _compute_pooled_kv():
        # w-parity split of the flattened (HW, C) image via stride-2 sublane
        # reads (row index = h*W + w; W even => even index <=> even w).
        x_we = x_ref[pl.ds(0, HW // 2, stride=2), :].astype(jnp.bfloat16)   # w even
        x_wo = x_ref[pl.ds(1, HW // 2, stride=2), :].astype(jnp.bfloat16)   # w odd
        # ONE merged matmul per parity: w_pg = [w_phi | w_g]  -> (H*Wp, 2*Cip)
        pg_e = jnp.dot(x_we, wpg_ref[...], preferred_element_type=jnp.float32)
        pg_o = jnp.dot(x_wo, wpg_ref[...], preferred_element_type=jnp.float32)
        pw = jnp.maximum(pg_e, pg_o)              # pooled over w; row = h*Wp + jp
        # h-parity max.  Aligned path: pure re-tiling reshape + elementwise max.
        if Wp % 8 == 0:
            r4 = pw.reshape(Hp, 2, Wp, 2 * Cip)
            pooled = jnp.maximum(r4[:, 0], r4[:, 1]).reshape(HWp, 2 * Cip)
        else:
            pooled = jnp.concatenate(
                [jnp.maximum(pw[(2 * i) * Wp:(2 * i + 1) * Wp, :],
                             pw[(2 * i + 1) * Wp:(2 * i + 2) * Wp, :])
                 for i in range(Hp)], axis=0)
        # bias added once, after the max (bias is constant across the window)
        v = pooled + bpg_ref[...]                 # (HWp, 2*Cip) f32
        # phi stored transposed (once per batch) so per-tile matmul is plain NN;
        # split falls on a 128-lane boundary (Cip is a multiple of 128).
        phiT_s[...] = jnp.transpose(v[:, :Cip]).astype(jnp.bfloat16)   # (Cip, HWp)
        g_s[...] = v[:, Cip:].astype(jnp.bfloat16)                     # (HWp, Cip)

    # ---- per query tile ------------------------------------------------------
    q0 = pl.multiple_of(q * TQ, TQ)
    xq = x_ref[pl.ds(q0, TQ), :]                  # (TQ, C) f32, reused for residual
    theta = jnp.dot(xq.astype(jnp.bfloat16), wt_ref[...],
                    preferred_element_type=jnp.float32) + bt_ref[...]  # (TQ, Cip)

    # f = theta @ phi^T  (plain NN matmul; phi^T precomputed in scratch)
    f = jnp.dot(theta.astype(jnp.bfloat16), phiT_s[...],
                preferred_element_type=jnp.float32)                    # (TQ, HWp)

    # online-style softmax: normalize AFTER the PV matmul (exact reciprocal on
    # the tiny (TQ, 1) denominator instead of scaling the whole (TQ, HWp) map).
    m = jnp.max(f, axis=-1, keepdims=True)
    p = jnp.exp(f - m)
    s = jnp.sum(p, axis=-1, keepdims=True)
    y_un = jnp.dot(p.astype(jnp.bfloat16), g_s[...],
                   preferred_element_type=jnp.float32)                 # (TQ, Cip)
    y = y_un * pl.reciprocal(s, approx=False)

    # output projection with the BatchNorm/b_out fold pre-applied to wo / shift
    wy = jnp.dot(y.astype(jnp.bfloat16), wo_ref[...],
                 preferred_element_type=jnp.float32) + shift_ref[...]  # (TQ, C)

    # residual (f32)
    o_ref[...] = wy + xq


def nonlocal_block(x_nchw, params, *, tq=None):
    """x_nchw: (N, C, H, W) float32. Returns (N, C, H, W)."""
    N, C, H, W = x_nchw.shape
    assert H % 2 == 0 and W % 2 == 0, "sub_sample=True 2x2 max-pool needs even H, W"
    Ci = params["w_theta"].shape[1]
    HW = H * W
    Hp, Wp = H // 2, W // 2
    HWp = Hp * Wp

    if tq is None:
        tq = next((t for t in (1024, 512, 256, 128, 64, 32, 16, 8) if HW % t == 0), HW)
    assert HW % tq == 0

    # Pad the inter-channel dim to a lane-dense multiple of 128.  Zero-padded
    # phi/g/theta columns and w_out rows are exact no-ops through the dataflow.
    Cip = ((Ci + 127) // 128) * 128

    def padc(a):  # zero-pad last dim Ci -> Cip
        return a if Cip == Ci else jnp.pad(a, [(0, 0)] * (a.ndim - 1) + [(0, Cip - Ci)])

    # NCHW -> flat NHWC (rows ordered h*W + w).
    x_flat = jnp.transpose(x_nchw, (0, 2, 3, 1)).reshape(N, HW, C)

    # Fold eval-mode BatchNorm (general formula) + b_out into the output proj.
    eps = 1e-5
    inv_std = 1.0 / jnp.sqrt(params["bn_var"] + eps)
    scale = params["bn_gamma"] * inv_std                                   # (C,)
    shift = params["bn_beta"] - params["bn_mean"] * scale                  # (C,)
    w_out_p = params["w_out"] if Cip == Ci else jnp.pad(params["w_out"],
                                                        ((0, Cip - Ci), (0, 0)))
    wo_scaled = (w_out_p * scale[None, :]).astype(jnp.bfloat16)            # (Cip, C)
    out_shift = (params["b_out"] * scale + shift).reshape(1, C)            # (1, C) f32

    # Merge phi & g into a single projection (phi part in [:Cip], g in [Cip:]).
    w_pg = jnp.concatenate([padc(params["w_phi"]), padc(params["w_g"])],
                           axis=1).astype(jnp.bfloat16)                    # (C, 2*Cip)
    b_pg = jnp.concatenate([padc(params["b_phi"].reshape(1, Ci)),
                            padc(params["b_g"].reshape(1, Ci))], axis=1)   # (1, 2*Cip)
    w_theta = padc(params["w_theta"]).astype(jnp.bfloat16)                 # (C, Cip)
    b_theta = padc(params["b_theta"].reshape(1, Ci))                       # (1, Cip)

    # VMEM budget: double-buffered blocks + persistent scratch + intermediates.
    est = (2 * (HW * C * 4) + 2 * (tq * C * 4)                 # x block + out tile
           + 2 * 2 * (C * Cip + C * 2 * Cip + Cip * C)         # bf16 weights (x2 buf)
           + 2 * (2 * Cip + Cip + C) * 4                       # f32 bias blocks (x2)
           + 2 * HWp * Cip * 2                                 # phi^T + g scratch bf16
           + 2 * (HW // 2) * 2 * Cip * 4 + HWp * 2 * Cip * 4   # prologue temps f32
           + 3 * tq * HWp * 4 + 2 * tq * Cip * 4)              # per-tile temps f32
    try:
        cap = int(pltpu.get_tpu_info().vmem_capacity_bytes)    # 64 MiB v7x, 128 MiB v5e/v6e
    except Exception:
        cap = 64 * 1024 * 1024
    vmem_limit = int(min(max(2 * est, 32 * 1024 * 1024), int(cap * 0.85)))

    kernel = functools.partial(_nonlocal_kernel, H=H, W=W, Cip=Cip, TQ=tq)

    out = pl.pallas_call(
        kernel,
        out_shape=jax.ShapeDtypeStruct((N, HW, C), jnp.float32),
        grid=(N, HW // tq),
        in_specs=[
            # full image per batch; block index constant across q => DMA'd once/batch
            pl.BlockSpec((None, HW, C), lambda b, q: (b, 0, 0)),
            pl.BlockSpec((C, Cip), lambda b, q: (0, 0)),
            pl.BlockSpec((1, Cip), lambda b, q: (0, 0)),
            pl.BlockSpec((C, 2 * Cip), lambda b, q: (0, 0)),
            pl.BlockSpec((1, 2 * Cip), lambda b, q: (0, 0)),
            pl.BlockSpec((Cip, C), lambda b, q: (0, 0)),
            pl.BlockSpec((1, C), lambda b, q: (0, 0)),
        ],
        out_specs=pl.BlockSpec((None, tq, C), lambda b, q: (b, q, 0)),
        scratch_shapes=[
            pltpu.VMEM((Cip, HWp), jnp.bfloat16),   # phi^T (pooled, biased)
            pltpu.VMEM((HWp, Cip), jnp.bfloat16),   # g     (pooled, biased)
        ],
        compiler_params=pltpu.CompilerParams(
            # q axis MUST stay "arbitrary": phi^T/g scratch computed at q==0 is
            # carried across q iterations of the same batch element.
            dimension_semantics=("parallel", "arbitrary"),
            vmem_limit_bytes=vmem_limit),
    )(x_flat, w_theta, b_theta, w_pg, b_pg, wo_scaled, out_shift)

    return jnp.transpose(out.reshape(N, H, W, C), (0, 3, 1, 2))


def make_params(key, C, Ci):
    ks = jax.random.split(key, 10)
    init = lambda k, shape: jax.random.normal(k, shape, jnp.float32) * 0.1
    return {
        "w_theta": init(ks[0], (C, Ci)), "b_theta": init(ks[1], (Ci,)),
        "w_phi": init(ks[2], (C, Ci)), "b_phi": init(ks[3], (Ci,)),
        "w_g": init(ks[4], (C, Ci)), "b_g": init(ks[5], (Ci,)),
        "w_out": init(ks[6], (Ci, C)), "b_out": init(ks[7], (C,)),
        # nonzero BN params so the non-identity path is exercised
        "bn_gamma": init(ks[8], (C,)) + 1.0, "bn_beta": init(ks[9], (C,)),
        "bn_mean": jnp.zeros((C,), jnp.float32),
        "bn_var": jnp.ones((C,), jnp.float32),
    }


def reference_forward(x, params, eps=1e-5):
    """Pure-JAX mirror of the PyTorch NonLocalBlock.forward (NCHW, eval-mode BN)."""
    N, C, H, W = x.shape
    Ci = params["w_theta"].shape[1]

    def conv1x1(t, w, b):                       # w: (Cin, Cout)
        return jnp.einsum("nchw,co->nohw", t, w) + b.reshape(1, -1, 1, 1)

    def maxpool2(t):
        n, c, h, w = t.shape
        return jnp.max(t.reshape(n, c, h // 2, 2, w // 2, 2), axis=(3, 5))

    g_x = maxpool2(conv1x1(x, params["w_g"], params["b_g"])).reshape(N, Ci, -1)
    g_x = jnp.transpose(g_x, (0, 2, 1))
    theta_x = conv1x1(x, params["w_theta"], params["b_theta"]).reshape(N, Ci, -1)
    theta_x = jnp.transpose(theta_x, (0, 2, 1))
    phi_x = maxpool2(conv1x1(x, params["w_phi"], params["b_phi"])).reshape(N, Ci, -1)

    f = jnp.einsum("nij,njk->nik", theta_x, phi_x)
    f_div_C = jax.nn.softmax(f, axis=-1)
    y = jnp.einsum("nij,njk->nik", f_div_C, g_x)
    y = jnp.transpose(y, (0, 2, 1)).reshape(N, Ci, H, W)

    w_y = conv1x1(y, params["w_out"], params["b_out"])
    inv_std = 1.0 / jnp.sqrt(params["bn_var"] + eps)
    scale = (params["bn_gamma"] * inv_std).reshape(1, -1, 1, 1)
    shift = (params["bn_beta"] - params["bn_mean"] * params["bn_gamma"] * inv_std
             ).reshape(1, -1, 1, 1)
    w_y = w_y * scale + shift
    return w_y + x


if __name__ == "__main__":
    key = jax.random.PRNGKey(0)
    kx, kp = jax.random.split(key)

    N, C, H, W = 2, 4, 16, 16          # in_channels=4 -> inter_channels=2
    Ci = C // 2
    x = jax.random.normal(kx, (N, C, H, W), jnp.float32)
    params = make_params(kp, C, Ci)

    # tq=128 -> 2 query tiles per image: exercises the per-batch phi/g scratch reuse
    run = jax.jit(functools.partial(nonlocal_block, tq=128))
    z = jax.block_until_ready(run(x, params))

    z_ref = reference_forward(x, params)
    assert z.shape == (N, C, H, W)
    # bf16 MXU inputs => loosened tolerance vs f32 reference
    assert jnp.allclose(z, z_ref, rtol=2e-2, atol=2e-2), (
        f"max abs err {jnp.max(jnp.abs(z - z_ref))}")

    print("KERNEL_OK")
</pallas_src>

<mosaic_0001>
module attributes {stable_mosaic.version = 11 : i64} {
  func.func @_nonlocal_kernel(%arg0: i32, %arg1: i32, %arg2: memref<1x256x4xf32, #tpu.memory_space<vmem>>, %arg3: memref<4x128xbf16, #tpu.memory_space<vmem>>, %arg4: memref<1x128xf32, #tpu.memory_space<vmem>>, %arg5: memref<4x256xbf16, #tpu.memory_space<vmem>>, %arg6: memref<1x256xf32, #tpu.memory_space<vmem>>, %arg7: memref<128x4xbf16, #tpu.memory_space<vmem>>, %arg8: memref<1x4xf32, #tpu.memory_space<vmem>>, %arg9: memref<1x128x4xf32, #tpu.memory_space<vmem>>, %arg10: memref<128x64xbf16, #tpu.memory_space<vmem>>, %arg11: memref<64x128xbf16, #tpu.memory_space<vmem>>) attributes {dimension_semantics = [#tpu.dimension_semantics<parallel>, #tpu.dimension_semantics<arbitrary>], iteration_bounds = array<i64: 2, 2>, scalar_prefetch = 0 : i64, scratch_operands = 2 : i64, tpu.core_type = #tpu.core_type<tc>, window_params = [{transform_indices = @transform_0, window_bounds = array<i64: 1, 256, 4>}, {pipeline_mode = #tpu.pipeline_mode<synchronous>, transform_indices = @transform_1, window_bounds = array<i64: 4, 128>}, {pipeline_mode = #tpu.pipeline_mode<synchronous>, transform_indices = @transform_2, window_bounds = array<i64: 1, 128>}, {pipeline_mode = #tpu.pipeline_mode<synchronous>, transform_indices = @transform_3, window_bounds = array<i64: 4, 256>}, {pipeline_mode = #tpu.pipeline_mode<synchronous>, transform_indices = @transform_4, window_bounds = array<i64: 1, 256>}, {pipeline_mode = #tpu.pipeline_mode<synchronous>, transform_indices = @transform_5, window_bounds = array<i64: 128, 4>}, {pipeline_mode = #tpu.pipeline_mode<synchronous>, transform_indices = @transform_6, window_bounds = array<i64: 1, 4>}, {transform_indices = @transform_7, window_bounds = array<i64: 1, 128, 4>}]} {
    %c0_i32 = arith.constant 0 : i32
    %0 = arith.cmpi eq, %arg1, %c0_i32 : i32
    %1 = arith.extui %0 : i1 to i32
    %c0_i32_0 = arith.constant 0 : i32
    %2 = arith.cmpi ne, %1, %c0_i32_0 : i32
    scf.if %2 {
      %c0_22 = arith.constant 0 : index
      %c0_23 = arith.constant 0 : index
      %c0_24 = arith.constant 0 : index
      %40 = tpu.strided_load %arg2[%c0_22, %c0_23, %c0_24] {strides = array<i32: 1, 2, 1>} : memref<1x256x4xf32, #tpu.memory_space<vmem>>, vector<1x128x4xf32>
      %41 = vector.shape_cast %40 : vector<1x128x4xf32> to vector<128x4xf32>
      %42 = arith.truncf %41 : vector<128x4xf32> to vector<128x4xbf16>
      %c0_25 = arith.constant 0 : index
      %c1 = arith.constant 1 : index
      %c0_26 = arith.constant 0 : index
      %43 = tpu.strided_load %arg2[%c0_25, %c1, %c0_26] {strides = array<i32: 1, 2, 1>} : memref<1x256x4xf32, #tpu.memory_space<vmem>>, vector<1x128x4xf32>
      %44 = vector.shape_cast %43 : vector<1x128x4xf32> to vector<128x4xf32>
      %45 = arith.truncf %44 : vector<128x4xf32> to vector<128x4xbf16>
      %c0_27 = arith.constant 0 : index
      %c0_28 = arith.constant 0 : index
      %46 = vector.load %arg5[%c0_27, %c0_28] : memref<4x256xbf16, #tpu.memory_space<vmem>>, vector<4x256xbf16>
      %cst_29 = arith.constant dense<0.000000e+00> : vector<128x256xf32>
      %47 = tpu.matmul %42, %46, %cst_29 {dimension_numbers = #tpu.dot_dimension_numbers<[1], [0], [0], [1], [0, 0, 1, 1], [], []>} : vector<128x4xbf16>, vector<4x256xbf16>, vector<128x256xf32> -> vector<128x256xf32>
      %c0_30 = arith.constant 0 : index
      %c0_31 = arith.constant 0 : index
      %48 = vector.load %arg5[%c0_30, %c0_31] : memref<4x256xbf16, #tpu.memory_space<vmem>>, vector<4x256xbf16>
      %cst_32 = arith.constant dense<0.000000e+00> : vector<128x256xf32>
      %49 = tpu.matmul %45, %48, %cst_32 {dimension_numbers = #tpu.dot_dimension_numbers<[1], [0], [0], [1], [0, 0, 1, 1], [], []>} : vector<128x4xbf16>, vector<4x256xbf16>, vector<128x256xf32> -> vector<128x256xf32>
      %50 = arith.maximumf %47, %49 : vector<128x256xf32>
      %51 = vector.shape_cast %50 : vector<128x256xf32> to vector<8x2x8x256xf32>
      %52 = vector.extract_strided_slice %51 {offsets = [0, 0, 0, 0], sizes = [8, 1, 8, 256], strides = [1, 1, 1, 1]} : vector<8x2x8x256xf32> to vector<8x1x8x256xf32>
      %53 = vector.shape_cast %52 : vector<8x1x8x256xf32> to vector<8x8x256xf32>
      %54 = vector.extract_strided_slice %51 {offsets = [0, 1, 0, 0], sizes = [8, 1, 8, 256], strides = [1, 1, 1, 1]} : vector<8x2x8x256xf32> to vector<8x1x8x256xf32>
      %55 = vector.shape_cast %54 : vector<8x1x8x256xf32> to vector<8x8x256xf32>
      %56 = arith.maximumf %53, %55 : vector<8x8x256xf32>
      %57 = vector.shape_cast %56 : vector<8x8x256xf32> to vector<64x256xf32>
      %c0_33 = arith.constant 0 : index
      %c0_34 = arith.constant 0 : index
      %58 = vector.load %arg6[%c0_33, %c0_34] : memref<1x256xf32, #tpu.memory_space<vmem>>, vector<1x256xf32>
      %59 = vector.broadcast %58 : vector<1x256xf32> to vector<64x256xf32>
      %60 = arith.addf %57, %59 : vector<64x256xf32>
      %61 = vector.extract_strided_slice %60 {offsets = [0, 0], sizes = [64, 128], strides = [1, 1]} : vector<64x256xf32> to vector<64x128xf32>
      %62 = tpu.transpose %61, [1, 0] : vector<64x128xf32> -> vector<128x64xf32>
      %63 = arith.truncf %62 : vector<128x64xf32> to vector<128x64xbf16>
      %c0_35 = arith.constant 0 : index
      %c0_36 = arith.constant 0 : index
      %64 = vector.load %arg10[%c0_35, %c0_36] : memref<128x64xbf16, #tpu.memory_space<vmem>>, vector<128x64xbf16>
      tpu.vector_store %arg10[%c0_35, %c0_36], %63 {strides = array<i32>} : memref<128x64xbf16, #tpu.memory_space<vmem>>, vector<128x64xbf16>,
      %65 = vector.extract_strided_slice %60 {offsets = [0, 128], sizes = [64, 128], strides = [1, 1]} : vector<64x256xf32> to vector<64x128xf32>
      %66 = arith.truncf %65 : vector<64x128xf32> to vector<64x128xbf16>
      %c0_37 = arith.constant 0 : index
      %c0_38 = arith.constant 0 : index
      %67 = vector.load %arg11[%c0_37, %c0_38] : memref<64x128xbf16, #tpu.memory_space<vmem>>, vector<64x128xbf16>
      tpu.vector_store %arg11[%c0_37, %c0_38], %66 {strides = array<i32>} : memref<64x128xbf16, #tpu.memory_space<vmem>>, vector<64x128xbf16>,
    } else {
    }
    %c128_i32 = arith.constant 128 : i32
    %3 = arith.muli %arg1, %c128_i32 : i32
    %4 = tpu.assume_multiple %3, 128 : i32
    %c0 = arith.constant 0 : index
    %5 = arith.index_cast %4 : i32 to index
    %c0_1 = arith.constant 0 : index
    %6 = vector.load %arg2[%c0, %5, %c0_1] : memref<1x256x4xf32, #tpu.memory_space<vmem>>, vector<1x128x4xf32>
    %7 = vector.shape_cast %6 : vector<1x128x4xf32> to vector<128x4xf32>
    %8 = arith.truncf %7 : vector<128x4xf32> to vector<128x4xbf16>
    %c0_2 = arith.constant 0 : index
    %c0_3 = arith.constant 0 : index
    %9 = vector.load %arg3[%c0_2, %c0_3] : memref<4x128xbf16, #tpu.memory_space<vmem>>, vector<4x128xbf16>
    %cst = arith.constant dense<0.000000e+00> : vector<128x128xf32>
    %10 = tpu.matmul %8, %9, %cst {dimension_numbers = #tpu.dot_dimension_numbers<[1], [0], [0], [1], [0, 0, 1, 1], [], []>} : vector<128x4xbf16>, vector<4x128xbf16>, vector<128x128xf32> -> vector<128x128xf32>
    %c0_4 = arith.constant 0 : index
    %c0_5 = arith.constant 0 : index
    %11 = vector.load %arg4[%c0_4, %c0_5] : memref<1x128xf32, #tpu.memory_space<vmem>>, vector<1x128xf32>
    %12 = vector.broadcast %11 : vector<1x128xf32> to vector<128x128xf32>
    %13 = arith.addf %10, %12 : vector<128x128xf32>
    %14 = arith.truncf %13 : vector<128x128xf32> to vector<128x128xbf16>
    %c0_6 = arith.constant 0 : index
    %c0_7 = arith.constant 0 : index
    %15 = vector.load %arg10[%c0_6, %c0_7] : memref<128x64xbf16, #tpu.memory_space<vmem>>, vector<128x64xbf16>
    %cst_8 = arith.constant dense<0.000000e+00> : vector<128x64xf32>
    %16 = tpu.matmul %14, %15, %cst_8 {dimension_numbers = #tpu.dot_dimension_numbers<[1], [0], [0], [1], [0, 0, 1, 1], [], []>} : vector<128x128xbf16>, vector<128x64xbf16>, vector<128x64xf32> -> vector<128x64xf32>
    %cst_9 = arith.constant dense<0xFF800000> : vector<128xf32>
    %17 = vector.multi_reduction <maximumf>, %16, %cst_9 [1] : vector<128x64xf32> to vector<128xf32>
    %18 = vector.shape_cast %17 : vector<128xf32> to vector<128x1xf32>
    %19 = vector.broadcast %18 : vector<128x1xf32> to vector<128x64xf32>
    %20 = arith.subf %16, %19 : vector<128x64xf32>
    %21 = math.exp %20 : vector<128x64xf32>
    %cst_10 = arith.constant dense<0.000000e+00> : vector<128xf32>
    %22 = vector.multi_reduction <add>, %21, %cst_10 [1] : vector<128x64xf32> to vector<128xf32>
    %23 = vector.shape_cast %22 : vector<128xf32> to vector<128x1xf32>
    %24 = arith.truncf %21 : vector<128x64xf32> to vector<128x64xbf16>
    %c0_11 = arith.constant 0 : index
    %c0_12 = arith.constant 0 : index
    %25 = vector.load %arg11[%c0_11, %c0_12] : memref<64x128xbf16, #tpu.memory_space<vmem>>, vector<64x128xbf16>
    %cst_13 = arith.constant dense<0.000000e+00> : vector<128x128xf32>
    %26 = tpu.matmul %24, %25, %cst_13 {dimension_numbers = #tpu.dot_dimension_numbers<[1], [0], [0], [1], [0, 0, 1, 1], [], []>} : vector<128x64xbf16>, vector<64x128xbf16>, vector<128x128xf32> -> vector<128x128xf32>
    %27 = tpu.reciprocal %23 : vector<128x1xf32> -> vector<128x1xf32>
    %28 = vector.broadcast %27 : vector<128x1xf32> to vector<128x128xf32>
    %29 = arith.mulf %26, %28 : vector<128x128xf32>
    %30 = arith.truncf %29 : vector<128x128xf32> to vector<128x128xbf16>
    %c0_14 = arith.constant 0 : index
    %c0_15 = arith.constant 0 : index
    %31 = vector.load %arg7[%c0_14, %c0_15] : memref<128x4xbf16, #tpu.memory_space<vmem>>, vector<128x4xbf16>
    %cst_16 = arith.constant dense<0.000000e+00> : vector<128x4xf32>
    %32 = tpu.matmul %30, %31, %cst_16 {dimension_numbers = #tpu.dot_dimension_numbers<[1], [0], [0], [1], [0, 0, 1, 1], [], []>} : vector<128x128xbf16>, vector<128x4xbf16>, vector<128x4xf32> -> vector<128x4xf32>
    %c0_17 = arith.constant 0 : index
    %c0_18 = arith.constant 0 : index
    %33 = vector.load %arg8[%c0_17, %c0_18] : memref<1x4xf32, #tpu.memory_space<vmem>>, vector<1x4xf32>
    %34 = vector.broadcast %33 : vector<1x4xf32> to vector<128x4xf32>
    %35 = arith.addf %32, %34 : vector<128x4xf32>
    %36 = arith.addf %35, %7 : vector<128x4xf32>
    %c0_19 = arith.constant 0 : index
    %c0_20 = arith.constant 0 : index
    %c0_21 = arith.constant 0 : index
    %37 = vector.load %arg9[%c0_19, %c0_20, %c0_21] : memref<1x128x4xf32, #tpu.memory_space<vmem>>, vector<1x128x4xf32>
    %38 = vector.shape_cast %37 : vector<1x128x4xf32> to vector<128x4xf32>
    %39 = vector.shape_cast %36 : vector<128x4xf32> to vector<1x128x4xf32>
    tpu.vector_store %arg9[%c0_19, %c0_20, %c0_21], %39 {strides = array<i32>} : memref<1x128x4xf32, #tpu.memory_space<vmem>>, vector<1x128x4xf32>,
    return
  }
  func.func @transform_0(%arg0: i32, %arg1: i32) -> (i32, i32, i32) {
    %c0_i32 = arith.constant 0 : i32
    %c0_i32_0 = arith.constant 0 : i32
    %c0_i32_1 = arith.constant 0 : i32
    return %arg0, %c0_i32, %c0_i32_0 : i32, i32, i32
  }
  func.func @transform_1(%arg0: i32, %arg1: i32) -> (i32, i32) {
    %c0_i32 = arith.constant 0 : i32
    %c0_i32_0 = arith.constant 0 : i32
    %c0_i32_1 = arith.constant 0 : i32
    return %c0_i32, %c0_i32_0 : i32, i32
  }
  func.func @transform_2(%arg0: i32, %arg1: i32) -> (i32, i32) {
    %c0_i32 = arith.constant 0 : i32
    %c0_i32_0 = arith.constant 0 : i32
    %c0_i32_1 = arith.constant 0 : i32
    return %c0_i32, %c0_i32_0 : i32, i32
  }
  func.func @transform_3(%arg0: i32, %arg1: i32) -> (i32, i32) {
    %c0_i32 = arith.constant 0 : i32
    %c0_i32_0 = arith.constant 0 : i32
    %c0_i32_1 = arith.constant 0 : i32
    return %c0_i32, %c0_i32_0 : i32, i32
  }
  func.func @transform_4(%arg0: i32, %arg1: i32) -> (i32, i32) {
    %c0_i32 = arith.constant 0 : i32
    %c0_i32_0 = arith.constant 0 : i32
    %c0_i32_1 = arith.constant 0 : i32
    return %c0_i32, %c0_i32_0 : i32, i32
  }
  func.func @transform_5(%arg0: i32, %arg1: i32) -> (i32, i32) {
    %c0_i32 = arith.constant 0 : i32
    %c0_i32_0 = arith.constant 0 : i32
    %c0_i32_1 = arith.constant 0 : i32
    return %c0_i32, %c0_i32_0 : i32, i32
  }
  func.func @transform_6(%arg0: i32, %arg1: i32) -> (i32, i32) {
    %c0_i32 = arith.constant 0 : i32
    %c0_i32_0 = arith.constant 0 : i32
    %c0_i32_1 = arith.constant 0 : i32
    return %c0_i32, %c0_i32_0 : i32, i32
  }
  func.func @transform_7(%arg0: i32, %arg1: i32) -> (i32, i32, i32) {
    %c0_i32 = arith.constant 0 : i32
    %c0_i32_0 = arith.constant 0 : i32
    return %arg0, %arg1, %c0_i32 : i32, i32, i32
  }
}

</mosaic_0001>

<llo_original>
// kernel: nonlocal_block.1
$region0: #{nonlocal_block.1}
  #allocation0 [shape = 'u32[]', space=smem, size = 0x4, offset = 0x4, fixed_abs, tag = 'smem constant byte address 0x4 - core index']
  #allocation1 [shape = 'u32[144,128]{1,0:T(1,128)}', space=vmem, size = 0x12000, scoped, tag = 'internal scratch']
  #allocation2 [shape = 'bf16[128,64]{1,0:T(16,128)(2,1)}', space=vmem, size = 0x8000, scoped, tag = 'scratch operand']
  #allocation3 [shape = 'bf16[64,128]{1,0:T(16,128)(2,1)}', space=vmem, size = 0x4000, scoped, tag = 'scratch operand']
  %s0 = inlined_call_operand.vmem [shape: f32[2,256,4], index: 0, kind: input, shape index: {}]
  %s1 = inlined_call_operand.vmem [shape: bf16[4,128], index: 1, kind: input, shape index: {}]
  %s2 = inlined_call_operand.vmem [shape: f32[1,128], index: 2, kind: input, shape index: {}]
  %s3 = inlined_call_operand.vmem [shape: bf16[4,256], index: 3, kind: input, shape index: {}]
  %s4 = inlined_call_operand.vmem [shape: f32[1,256], index: 4, kind: input, shape index: {}]
  %s5 = inlined_call_operand.vmem [shape: bf16[128,4], index: 5, kind: input, shape index: {}]
  %s6 = inlined_call_operand.vmem [shape: f32[1,4], index: 6, kind: input, shape index: {}]
  %s7 = inlined_call_operand.vmem [shape: f32[2,256,4], index: 7, kind: output, shape index: {}]
  %s8 = sld [smem:[#allocation0]]
  $region65: #{nonlocal_block.1} parent=0
    _
  %s10 = ssub.s32 1, %s8
  %s11 = scalar_select 0, %s10, %s8
  loop: start=0, step=1, limit=6
  $region2: #{nonlocal_block.1} parent=0 // loop_pre_header
    _
  $region3: #{nonlocal_block.1} parent=0 // loop_header
    %s13 = sphi 0, %s17
    %p14 = scmp.ge.s32.totalorder %s13, 6
    %s20 = sphi 0, %s32
    %s21 = sphi 0, %s28
    %s22 = sphi 0, %s20
    %s23 = sphi 0, %s21
    %s24 = sphi 0, %s22
    %s25 = sphi 0, %s23
    %s35 = sphi 0, %s37
    %s38 = sphi 0, %s35
    %s39 = sphi 0, %s38
    %s55 = sphi 0, %s39
    %s59 = sphi 0, %s59
    %s61 = sphi 0, %s59
    %s62 = sphi 0, %s61
    %s76 = sphi 0, %s62
    %s80 = sphi 0, %s80
    %s82 = sphi 0, %s80
    %s83 = sphi 0, %s82
    %s97 = sphi 0, %s83
    %s101 = sphi 0, %s101
    %s103 = sphi 0, %s101
    %s104 = sphi 0, %s103
    %s118 = sphi 0, %s104
    %s122 = sphi 0, %s122
    %s124 = sphi 0, %s122
    %s125 = sphi 0, %s124
    %s139 = sphi 0, %s125
    %s143 = sphi 0, %s143
    %s145 = sphi 0, %s143
    %s146 = sphi 0, %s145
    %s160 = sphi 0, %s146
    %s164 = sphi 0, %s164
    %s166 = sphi 0, %s164
    %s167 = sphi 0, %s166
    %s181 = sphi 0, %s167
    %s189 = sphi 0, %s191
    %s192 = sphi 0, %s189
    %s193 = sphi 0, %s192
    %s209 = sphi 0, %s193
  $region4: #{nonlocal_block.1} parent=0 // loop_header_branch
    %16 = sbr.rel (%p14) target = $region8
  $region5: #{nonlocal_block.1} parent=0 // loop_body
    %s18 = ssub.s32 %s13, 1
    %s19 = ssub.s32 %s13, 2
    %s26 = sadd.s32 1, %s21
    %p27 = scmp.ge.s32.totalorder %s26, 2
    %s28 = scalar_select %p27, 0, %s26
    %s29 = sadd.s32 1, %s20
    %s30 = scalar_select %p27, %s29, %s20
    %p31 = scmp.ge.s32.totalorder %s30, 2
    %s32 = scalar_select %p31, 0, %s30
    %s33 = ssub.s32 %s20, %s32
    %p34 = scmp.eq.s32.totalorder %s33, 0
    %s36 = sadd.s32 %s35, 1
    %s37 = scalar_select %p34, %s35, %s36
    %p40 = pneg %p34
    %p41 = scmp.eq.s32.totalorder %s13, 3
    %p42 = por %p40, %p41
    %p43 = scmp.ne.s32.totalorder %s35, %s38
    %p44 = scmp.eq.s32.totalorder %s13, 0
    %p45 = por %p43, %p44
    %p46 = scmp.ne.s32.totalorder %s35, %s38
    %p47 = scmp.eq.s32.totalorder %s18, 3
    %p48 = por %p46, %p47
    %p49 = scmp.ne.s32.totalorder %s38, %s39
    %p50 = scmp.eq.s32.totalorder %s18, 0
    %p51 = por %p49, %p50
    %p52 = scmp.ne.s32.totalorder %s38, %s39
    %p53 = scmp.eq.s32.totalorder %s19, 3
    %p54 = por %p52, %p53
    %p56 = scmp.ne.s32.totalorder %s39, %s55
    %p57 = scmp.eq.s32.totalorder %s19, 0
    %p58 = por %p56, %p57
    %s60 = sadd.s32 %s59, 1
    %p63 = scmp.eq.s32.totalorder %s13, 3
    %p64 = scmp.ne.s32.totalorder %s59, %s61
    %p65 = scmp.eq.s32.totalorder %s13, 0
    %p66 = por %p64, %p65
    %p67 = scmp.ne.s32.totalorder %s59, %s61
    %p68 = scmp.eq.s32.totalorder %s18, 3
    %p69 = por %p67, %p68
    %p70 = scmp.ne.s32.totalorder %s61, %s62
    %p71 = scmp.eq.s32.totalorder %s18, 0
    %p72 = por %p70, %p71
    %p73 = scmp.ne.s32.totalorder %s61, %s62
    %p74 = scmp.eq.s32.totalorder %s19, 3
    %p75 = por %p73, %p74
    %p77 = scmp.ne.s32.totalorder %s62, %s76
    %p78 = scmp.eq.s32.totalorder %s19, 0
    %p79 = por %p77, %p78
    %s81 = sadd.s32 %s80, 1
    %p84 = scmp.eq.s32.totalorder %s13, 3
    %p85 = scmp.ne.s32.totalorder %s80, %s82
    %p86 = scmp.eq.s32.totalorder %s13, 0
    %p87 = por %p85, %p86
    %p88 = scmp.ne.s32.totalorder %s80, %s82
    %p89 = scmp.eq.s32.totalorder %s18, 3
    %p90 = por %p88, %p89
    %p91 = scmp.ne.s32.totalorder %s82, %s83
    %p92 = scmp.eq.s32.totalorder %s18, 0
    %p93 = por %p91, %p92
    %p94 = scmp.ne.s32.totalorder %s82, %s83
    %p95 = scmp.eq.s32.totalorder %s19, 3
    %p96 = por %p94, %p95
    %p98 = scmp.ne.s32.totalorder %s83, %s97
    %p99 = scmp.eq.s32.totalorder %s19, 0
    %p100 = por %p98, %p99
    %s102 = sadd.s32 %s101, 1
    %p105 = scmp.eq.s32.totalorder %s13, 3
    %p106 = scmp.ne.s32.totalorder %s101, %s103
    %p107 = scmp.eq.s32.totalorder %s13, 0
    %p108 = por %p106, %p107
    %p109 = scmp.ne.s32.totalorder %s101, %s103
    %p110 = scmp.eq.s32.totalorder %s18, 3
    %p111 = por %p109, %p110
    %p112 = scmp.ne.s32.totalorder %s103, %s104
    %p113 = scmp.eq.s32.totalorder %s18, 0
    %p114 = por %p112, %p113
    %p115 = scmp.ne.s32.totalorder %s103, %s104
    %p116 = scmp.eq.s32.totalorder %s19, 3
    %p117 = por %p115, %p116
    %p119 = scmp.ne.s32.totalorder %s104, %s118
    %p120 = scmp.eq.s32.totalorder %s19, 0
    %p121 = por %p119, %p120
    %s123 = sadd.s32 %s122, 1
    %p126 = scmp.eq.s32.totalorder %s13, 3
    %p127 = scmp.ne.s32.totalorder %s122, %s124
    %p128 = scmp.eq.s32.totalorder %s13, 0
    %p129 = por %p127, %p128
    %p130 = scmp.ne.s32.totalorder %s122, %s124
    %p131 = scmp.eq.s32.totalorder %s18, 3
    %p132 = por %p130, %p131
    %p133 = scmp.ne.s32.totalorder %s124, %s125
    %p134 = scmp.eq.s32.totalorder %s18, 0
    %p135 = por %p133, %p134
    %p136 = scmp.ne.s32.totalorder %s124, %s125
    %p137 = scmp.eq.s32.totalorder %s19, 3
    %p138 = por %p136, %p137
    %p140 = scmp.ne.s32.totalorder %s125, %s139
    %p141 = scmp.eq.s32.totalorder %s19, 0
    %p142 = por %p140, %p141
    %s144 = sadd.s32 %s143, 1
    %p147 = scmp.eq.s32.totalorder %s13, 3
    %p148 = scmp.ne.s32.totalorder %s143, %s145
    %p149 = scmp.eq.s32.totalorder %s13, 0
    %p150 = por %p148, %p149
    %p151 = scmp.ne.s32.totalorder %s143, %s145
    %p152 = scmp.eq.s32.totalorder %s18, 3
    %p153 = por %p151, %p152
    %p154 = scmp.ne.s32.totalorder %s145, %s146
    %p155 = scmp.eq.s32.totalorder %s18, 0
    %p156 = por %p154, %p155
    %p157 = scmp.ne.s32.totalorder %s145, %s146
    %p158 = scmp.eq.s32.totalorder %s19, 3
    %p159 = por %p157, %p158
    %p161 = scmp.ne.s32.totalorder %s146, %s160
    %p162 = scmp.eq.s32.totalorder %s19, 0
    %p163 = por %p161, %p162
    %s165 = sadd.s32 %s164, 1
    %p168 = scmp.eq.s32.totalorder %s13, 3
    %p169 = scmp.ne.s32.totalorder %s164, %s166
    %p170 = scmp.eq.s32.totalorder %s13, 0
    %p171 = por %p169, %p170
    %p172 = scmp.ne.s32.totalorder %s164, %s166
    %p173 = scmp.eq.s32.totalorder %s18, 3
    %p174 = por %p172, %p173
    %p175 = scmp.ne.s32.totalorder %s166, %s167
    %p176 = scmp.eq.s32.totalorder %s18, 0
    %p177 = por %p175, %p176
    %p178 = scmp.ne.s32.totalorder %s166, %s167
    %p179 = scmp.eq.s32.totalorder %s19, 3
    %p180 = por %p178, %p179
    %p182 = scmp.ne.s32.totalorder %s167, %s181
    %p183 = scmp.eq.s32.totalorder %s19, 0
    %p184 = por %p182, %p183
    %s185 = ssub.s32 %s20, %s32
    %s186 = ssub.s32 %s21, %s28
    %s187 = sor.u32 %s185, %s186
    %p188 = scmp.eq.s32.totalorder %s187, 0
    %s190 = sadd.s32 %s189, 1
    %s191 = scalar_select %p188, %s189, %s190
    %p194 = pneg %p188
    %p195 = scmp.eq.s32.totalorder %s13, 3
    %p196 = por %p194, %p195
    %p197 = scmp.ne.s32.totalorder %s189, %s192
    %p198 = scmp.eq.s32.totalorder %s13, 0
    %p199 = por %p197, %p198
    %p200 = scmp.ne.s32.totalorder %s189, %s192
    %p201 = scmp.eq.s32.totalorder %s18, 3
    %p202 = por %p200, %p201
    %p203 = scmp.ne.s32.totalorder %s192, %s193
    %p204 = scmp.eq.s32.totalorder %s18, 0
    %p205 = por %p203, %p204
    %p206 = scmp.ne.s32.totalorder %s192, %s193
    %p207 = scmp.eq.s32.totalorder %s19, 3
    %p208 = por %p206, %p207
    %p210 = scmp.ne.s32.totalorder %s193, %s209
    %p211 = scmp.eq.s32.totalorder %s19, 0
    %p212 = por %p210, %p211
    %p213 = scmp.le.s32.totalorder 1, %s13
    %p214 = scmp.lt.s32.totalorder %s13, 5
    %p215 = pnand %p213, %p214
    %p216 = pneg %p215
    // Predicated region
    $region9: #{nonlocal_block.1} parent=5 // pred_check
      _
    $region10: #{nonlocal_block.1} parent=5 // pred_check_branch
      %218 = sbr.rel (%p215) target = $region12
    $region11: #{nonlocal_block.1} parent=5 // pred_region
      %s219 = ssub.s32 %s13, 1
      // Predicated region
      $region13: #{nonlocal_block.1} parent=11 // pred_check
        %p220 = pneg %p72
      $region14: #{nonlocal_block.1} parent=11 // pred_check_branch
        %222 = sbr.rel (%p220) target = $region16
      $region15: #{nonlocal_block.1} parent=11 // pred_region
        _
      $region16: #{nonlocal_block.1} parent=11 // pred_fallthru
        _
      // Predicated region
      $region17: #{nonlocal_block.1} parent=11 // pred_check
        %p223 = pneg %p93
      $region18: #{nonlocal_block.1} parent=11 // pred_check_branch
        %225 = sbr.rel (%p223) target = $region20
      $region19: #{nonlocal_block.1} parent=11 // pred_region
        _
      $region20: #{nonlocal_block.1} parent=11 // pred_fallthru
        _
      // Predicated region
      $region21: #{nonlocal_block.1} parent=11 // pred_check
        %p226 = pneg %p114
      $region22: #{nonlocal_block.1} parent=11 // pred_check_branch
        %228 = sbr.rel (%p226) target = $region24
      $region23: #{nonlocal_block.1} parent=11 // pred_region
        _
      $region24: #{nonlocal_block.1} parent=11 // pred_fallthru
        _
      // Predicated region
      $region25: #{nonlocal_block.1} parent=11 // pred_check
        %p229 = pneg %p135
      $region26: #{nonlocal_block.1} parent=11 // pred_check_branch
        %231 = sbr.rel (%p229) target = $region28
      $region27: #{nonlocal_block.1} parent=11 // pred_region
        _
      $region28: #{nonlocal_block.1} parent=11 // pred_fallthru
        _
      // Predicated region
      $region29: #{nonlocal_block.1} parent=11 // pred_check
        %p232 = pneg %p156
      $region30: #{nonlocal_block.1} parent=11 // pred_check_branch
        %234 = sbr.rel (%p232) target = $region32
      $region31: #{nonlocal_block.1} parent=11 // pred_region
        _
      $region32: #{nonlocal_block.1} parent=11 // pred_fallthru
        _
      // Predicated region
      $region33: #{nonlocal_block.1} parent=11 // pred_check
        %p235 = pneg %p177
      $region34: #{nonlocal_block.1} parent=11 // pred_check_branch
        %237 = sbr.rel (%p235) target = $region36
      $region35: #{nonlocal_block.1} parent=11 // pred_region
        _
      $region36: #{nonlocal_block.1} parent=11 // pred_fallthru
        _
    $region12: #{nonlocal_block.1} parent=5 // pred_fallthru
      _
    %p238 = scmp.lt.s32.totalorder %s13, 4
    // Predicated region
    $region37: #{nonlocal_block.1} parent=5 // pred_check
      %p239 = pneg %p238
    $region38: #{nonlocal_block.1} parent=5 // pred_check_branch
      %241 = sbr.rel (%p239) target = $region40
    $region39: #{nonlocal_block.1} parent=5 // pred_region
      // Predicated region
      $region41: #{nonlocal_block.1} parent=39 // pred_check
        %p242 = pneg %p45
      $region42: #{nonlocal_block.1} parent=39 // pred_check_branch
        %244 = sbr.rel (%p242) target = $region44
      $region43: #{nonlocal_block.1} parent=39 // pred_region
        %p245 = scmp.lt.s32.totalorder %s20, 1
        %s246 = scalar_select %p245, %s20, 1
        %s247 = smul.addr %s246, 32
        %s248 = smul.addr %s247, 8
        %s249 = scalar_lea.vmem %s0, %s248
      $region44: #{nonlocal_block.1} parent=39 // pred_fallthru
        _
    $region40: #{nonlocal_block.1} parent=5 // pred_fallthru
      _
    %p250 = scmp.le.s32.totalorder 1, %s13
    %p251 = scmp.lt.s32.totalorder %s13, 5
    %p252 = pnand %p250, %p251
    %p253 = pneg %p252
    // Predicated region
    $region45: #{nonlocal_block.1} parent=5 // pred_check
      _
    $region46: #{nonlocal_block.1} parent=5 // pred_check_branch
      %255 = sbr.rel (%p252) target = $region48
    $region47: #{nonlocal_block.1} parent=5 // pred_region
      %s256 = ssub.s32 %s13, 1
      %p257 = scmp.lt.s32.totalorder %s22, 1
      %s258 = scalar_select %p257, %s22, 1
      %s259 = smul.addr %s258, 32
      %s260 = smul.addr %s259, 8
      %s261 = scalar_lea.vmem %s0, %s260
      %p262 = pneg %p51
      %p263 = pneg %p48
      %p264 = pneg %p72
      %p265 = pneg %p69
      %p266 = pneg %p93
      %p267 = pneg %p90
      %p268 = pneg %p114
      %p269 = pneg %p111
      %p270 = pneg %p135
      %p271 = pneg %p132
      %p272 = pneg %p156
      %p273 = pneg %p153
      %p274 = pneg %p177
      %p275 = pneg %p174
      %p276 = pneg %p205
      %p277 = pneg %p202
      %s278 = smul.u32 16, %s23
      %p279 = scmp.lt.s32.totalorder %s22, 1
      %s280 = scalar_select %p279, %s22, 1
      %p281 = scmp.lt.s32.totalorder %s278, 31
      %s282 = scalar_select %p281, %s278, 31
      %s283 = smul.addr %s280, 32
      %s284 = sadd.s32 %s282, %s283
      %s285 = smul.addr %s284, 8
      %s286 = scalar_lea.vmem %s7, %s285
      %p287 = scmp.lt.s32.totalorder %s22, 1
      %s288 = scalar_select %p287, %s22, 1
      %s289 = smul.addr %s288, 32
      %s290 = smul.addr %s289, 8
      %s291 = scalar_lea.vmem %s0, %s290
      %s292 = smul.u32 16, %s23
      %p293 = scmp.lt.s32.totalorder %s22, 1
      %s294 = scalar_select %p293, %s22, 1
      %p295 = scmp.lt.s32.totalorder %s292, 31
      %s296 = scalar_select %p295, %s292, 31
      %s297 = smul.addr %s294, 32
      %s298 = sadd.s32 %s296, %s297
      %s299 = smul.addr %s298, 8
      %s300 = scalar_lea.vmem %s7, %s299
      %s301 = smul.u32 16, %s23
      %p303 = scmp.eq.s32.totalorder %s23, 0
      // Predicated region
      $region49: #{nonlocal_block.1} parent=47 // pred_check
        %p304 = pneg %p303
      $region50: #{nonlocal_block.1} parent=47 // pred_check_branch
        %306 = sbr.rel (%p304) target = $region52
      $region51: #{nonlocal_block.1} parent=47 // pred_region
        %v307 = vld [vmem:[%s291] ss:$2 sm:$0xff]
        %s308 = scalar_lea.vmem %s291, 16
        %v309 = vld [vmem:[%s308] ss:$2 sm:$0xff]
        %s310 = scalar_lea.vmem %s291, 32
        %v311 = vld [vmem:[%s310] ss:$2 sm:$0xff]
        %s312 = scalar_lea.vmem %s291, 48
        %v313 = vld [vmem:[%s312] ss:$2 sm:$0xff]
        %s314 = scalar_lea.vmem %s291, 64
        %v315 = vld [vmem:[%s314] ss:$2 sm:$0xff]
        %s316 = scalar_lea.vmem %s291, 80
        %v317 = vld [vmem:[%s316] ss:$2 sm:$0xff]
        %s318 = scalar_lea.vmem %s291, 96
        %v319 = vld [vmem:[%s318] ss:$2 sm:$0xff]
        %s320 = scalar_lea.vmem %s291, 112
        %v321 = vld [vmem:[%s320] ss:$2 sm:$0xff]
        %s322 = scalar_lea.vmem %s291, 128
        %v323 = vld [vmem:[%s322] ss:$2 sm:$0xff]
        %s324 = scalar_lea.vmem %s291, 144
        %v325 = vld [vmem:[%s324] ss:$2 sm:$0xff]
        %s326 = scalar_lea.vmem %s291, 160
        %v327 = vld [vmem:[%s326] ss:$2 sm:$0xff]
        %s328 = scalar_lea.vmem %s291, 176
        %v329 = vld [vmem:[%s328] ss:$2 sm:$0xff]
        %s330 = scalar_lea.vmem %s291, 192
        %v331 = vld [vmem:[%s330] ss:$2 sm:$0xff]
        %s332 = scalar_lea.vmem %s291, 208
        %v333 = vld [vmem:[%s332] ss:$2 sm:$0xff]
        %s334 = scalar_lea.vmem %s291, 224
        %v335 = vld [vmem:[%s334] ss:$2 sm:$0xff]
        %s336 = scalar_lea.vmem %s291, 240
        %v337 = vld [vmem:[%s336] ss:$2 sm:$0xff]
        %v338 = vpack.c.bf16 %v309, %v307
        %v339 = vpack.c.bf16 %v313, %v311
        %v340 = vpack.c.bf16 %v317, %v315
        %v341 = vpack.c.bf16 %v321, %v319
        %v342 = vpack.c.bf16 %v325, %v323
        %v343 = vpack.c.bf16 %v329, %v327
        %v344 = vpack.c.bf16 %v333, %v331
        %v345 = vpack.c.bf16 %v337, %v335
        %s346 = scalar_lea.vmem %s291, 1
        %v347 = vld [vmem:[%s346] ss:$2 sm:$0xff]
        %s348 = scalar_lea.vmem %s291, 17
        %v349 = vld [vmem:[%s348] ss:$2 sm:$0xff]
        %s350 = scalar_lea.vmem %s291, 33
        %v351 = vld [vmem:[%s350] ss:$2 sm:$0xff]
        %s352 = scalar_lea.vmem %s291, 49
        %v353 = vld [vmem:[%s352] ss:$2 sm:$0xff]
        %s354 = scalar_lea.vmem %s291, 65
        %v355 = vld [vmem:[%s354] ss:$2 sm:$0xff]
        %s356 = scalar_lea.vmem %s291, 81
        %v357 = vld [vmem:[%s356] ss:$2 sm:$0xff]
        %s358 = scalar_lea.vmem %s291, 97
        %v359 = vld [vmem:[%s358] ss:$2 sm:$0xff]
        %s360 = scalar_lea.vmem %s291, 113
        %v361 = vld [vmem:[%s360] ss:$2 sm:$0xff]
        %s362 = scalar_lea.vmem %s291, 129
        %v363 = vld [vmem:[%s362] ss:$2 sm:$0xff]
        %s364 = scalar_lea.vmem %s291, 145
        %v365 = vld [vmem:[%s364] ss:$2 sm:$0xff]
        %s366 = scalar_lea.vmem %s291, 161
        %v367 = vld [vmem:[%s366] ss:$2 sm:$0xff]
        %s368 = scalar_lea.vmem %s291, 177
        %v369 = vld [vmem:[%s368] ss:$2 sm:$0xff]
        %s370 = scalar_lea.vmem %s291, 193
        %v371 = vld [vmem:[%s370] ss:$2 sm:$0xff]
        %s372 = scalar_lea.vmem %s291, 209
        %v373 = vld [vmem:[%s372] ss:$2 sm:$0xff]
        %s374 = scalar_lea.vmem %s291, 225
        %v375 = vld [vmem:[%s374] ss:$2 sm:$0xff]
        %s376 = scalar_lea.vmem %s291, 241
        %v377 = vld [vmem:[%s376] ss:$2 sm:$0xff]
        %v378 = vpack.c.bf16 %v349, %v347
        %v379 = vpack.c.bf16 %v353, %v351
        %v380 = vpack.c.bf16 %v357, %v355
        %v381 = vpack.c.bf16 %v361, %v359
        %v382 = vpack.c.bf16 %v365, %v363
        %v383 = vpack.c.bf16 %v369, %v367
        %v384 = vpack.c.bf16 %v373, %v371
        %v385 = vpack.c.bf16 %v377, %v375
        %v386 = vld [vmem:[%s3] sm:$0xf]
        %v389 = vunpack.c.l.s4 1983009808
        %v390 = vunpack.c.0.s8 %v389
        %v391 = vlaneseq
        %v392 = vshrl.u32 %v391, 7
        %v393 = vsub.s32 %v390, %v392
        %v394 = vrot.slane %v386, %v393
        %v395 = vcombine.high %v394, %v394
        %vm396 = vcmask 31744
        %v398 = vsel %vm396, %v338, 0
        %v401 = vsel %vm396, %v339, 0
        %v404 = vsel %vm396, %v340, 0
        %v407 = vsel %vm396, %v341, 0
        %v410 = vsel %vm396, %v342, 0
        %v413 = vsel %vm396, %v343, 0
        %v416 = vsel %vm396, %v344, 0
        %v419 = vsel %vm396, %v345, 0
        %vm421 = vcmask 1041408
        %v423 = vsel %vm421, %v394, 0
        %v426 = vsel %vm421, %v395, 0
        %428 = vmatprep.subr.bf16.mxu0 %v426
        %429 = vmatpush1.bf16.msra.mxu0 %v423
        %430 = vmatprep.subr.bf16.mxu0 0
        %431 = vmatpush1.bf16.msra.mxu0 0
        %432 = vmatprep.subr.bf16.mxu0 0
        %433 = vmatpush1.bf16.msra.mxu0 0
        %434 = vmatprep.subr.bf16.mxu0 0
        %435 = vmatpush1.bf16.msra.mxu0 0
        %436 = vmatprep.subr.bf16.mxu0 0
        %437 = vmatpush1.bf16.msra.mxu0 0
        %438 = vmatprep.subr.bf16.mxu0 0
        %439 = vmatpush1.bf16.msra.mxu0 0
        %440 = vmatprep.subr.bf16.mxu0 0
        %441 = vmatpush1.bf16.msra.mxu0 0
        %442 = vmatprep.subr.bf16.mxu0 0
        %443 = vmatpush1.bf16.msra.mxu0 0
        %444 = vmatprep.subr.bf16.mxu0 0
        %445 = vmatpush1.bf16.msra.mxu0 0
        %446 = vmatprep.subr.bf16.mxu0 0
        %447 = vmatpush1.bf16.msra.mxu0 0
        %448 = vmatprep.subr.bf16.mxu0 0
        %449 = vmatpush1.bf16.msra.mxu0 0
        %450 = vmatprep.subr.bf16.mxu0 0
        %451 = vmatpush1.bf16.msra.mxu0 0
        %452 = vmatprep.subr.bf16.mxu0 0
        %453 = vmatpush1.bf16.msra.mxu0 0
        %454 = vmatprep.subr.bf16.mxu0 0
        %455 = vmatpush1.bf16.msra.mxu0 0
        %456 = vmatprep.subr.bf16.mxu0 0
        %457 = vmatpush1.bf16.msra.mxu0 0
        %458 = vmatprep.subr.bf16.mxu0 0
        %459 = vmatpush1.bf16.msra.mxu0 0
        %460 = vmatprep.mubr.bf16.mxu0 0
        %461 = vmatmul.mubr.bf16.gmra.mrb[0].mxu0 %v398
        %v462 = vpop.f32.mrb[0].mxu0
        %v463 = vadd.f32 0.0, %v462
        %v464 = vpop.f32.mrb[0].mxu0
        %v465 = vadd.f32 0.0, %v464
        %v466 = vpop.f32.mrb[0].mxu0
        %v467 = vadd.f32 0.0, %v466
        %v468 = vpop.f32.mrb[0].mxu0
        %v469 = vadd.f32 0.0, %v468
        %470 = vmatprep.mubr.bf16.mxu0 0
        %471 = vmatmul.mubr.bf16.gmra.mrb[0].mxu0 %v401
        %v472 = vpop.f32.mrb[0].mxu0
        %v473 = vadd.f32 0.0, %v472
        %v474 = vpop.f32.mrb[0].mxu0
        %v475 = vadd.f32 0.0, %v474
        %v476 = vpop.f32.mrb[0].mxu0
        %v477 = vadd.f32 0.0, %v476
        %v478 = vpop.f32.mrb[0].mxu0
        %v479 = vadd.f32 0.0, %v478
        %480 = vmatprep.mubr.bf16.mxu0 0
        %481 = vmatmul.mubr.bf16.gmra.mrb[0].mxu0 %v404
        %v482 = vpop.f32.mrb[0].mxu0
        %v483 = vadd.f32 0.0, %v482
        %v484 = vpop.f32.mrb[0].mxu0
        %v485 = vadd.f32 0.0, %v484
        %v486 = vpop.f32.mrb[0].mxu0
        %v487 = vadd.f32 0.0, %v486
        %v488 = vpop.f32.mrb[0].mxu0
        %v489 = vadd.f32 0.0, %v488
        %490 = vmatprep.mubr.bf16.mxu0 0
        %491 = vmatmul.mubr.bf16.gmra.mrb[0].mxu0 %v407
        %v492 = vpop.f32.mrb[0].mxu0
        %v493 = vadd.f32 0.0, %v492
        %v494 = vpop.f32.mrb[0].mxu0
        %v495 = vadd.f32 0.0, %v494
        %v496 = vpop.f32.mrb[0].mxu0
        %v497 = vadd.f32 0.0, %v496
        %v498 = vpop.f32.mrb[0].mxu0
        %v499 = vadd.f32 0.0, %v498
        %500 = vmatprep.mubr.bf16.mxu0 0
        %501 = vmatmul.mubr.bf16.gmra.mrb[0].mxu0 %v410
        %v502 = vpop.f32.mrb[0].mxu0
        %v503 = vadd.f32 0.0, %v502
        %v504 = vpop.f32.mrb[0].mxu0
        %v505 = vadd.f32 0.0, %v504
        %v506 = vpop.f32.mrb[0].mxu0
        %v507 = vadd.f32 0.0, %v506
        %v508 = vpop.f32.mrb[0].mxu0
        %v509 = vadd.f32 0.0, %v508
        %510 = vmatprep.mubr.bf16.mxu0 0
        %511 = vmatmul.mubr.bf16.gmra.mrb[0].mxu0 %v413
        %v512 = vpop.f32.mrb[0].mxu0
        %v513 = vadd.f32 0.0, %v512
        %v514 = vpop.f32.mrb[0].mxu0
        %v515 = vadd.f32 0.0, %v514
        %v516 = vpop.f32.mrb[0].mxu0
        %v517 = vadd.f32 0.0, %v516
        %v518 = vpop.f32.mrb[0].mxu0
        %v519 = vadd.f32 0.0, %v518
        %520 = vmatprep.mubr.bf16.mxu0 0
        %521 = vmatmul.mubr.bf16.gmra.mrb[0].mxu0 %v416
        %v522 = vpop.f32.mrb[0].mxu0
        %v523 = vadd.f32 0.0, %v522
        %v524 = vpop.f32.mrb[0].mxu0
        %v525 = vadd.f32 0.0, %v524
        %v526 = vpop.f32.mrb[0].mxu0
        %v527 = vadd.f32 0.0, %v526
        %v528 = vpop.f32.mrb[0].mxu0
        %v529 = vadd.f32 0.0, %v528
        %530 = vmatprep.mubr.bf16.mxu0 0
        %531 = vmatmul.mubr.bf16.gmra.mrb[0].mxu0 %v419
        %v532 = vpop.f32.mrb[0].mxu0
        %v533 = vadd.f32 0.0, %v532
        %v534 = vpop.f32.mrb[0].mxu0
        %v535 = vadd.f32 0.0, %v534
        %v536 = vpop.f32.mrb[0].mxu0
        %v537 = vadd.f32 0.0, %v536
        %v538 = vpop.f32.mrb[0].mxu0
        %v539 = vadd.f32 0.0, %v538
        %540 = vdwg.mxu0
        %v542 = vsel %vm396, %v378, 0
        %v545 = vsel %vm396, %v379, 0
        %v548 = vsel %vm396, %v380, 0
        %v551 = vsel %vm396, %v381, 0
        %v554 = vsel %vm396, %v382, 0
        %v557 = vsel %vm396, %v383, 0
        %v560 = vsel %vm396, %v384, 0
        %v563 = vsel %vm396, %v385, 0
        %565 = vmatprep.subr.bf16.mxu0 %v426
        %566 = vmatpush1.bf16.msra.mxu0 %v423
        %567 = vmatprep.subr.bf16.mxu0 0
        %568 = vmatpush1.bf16.msra.mxu0 0
        %569 = vmatprep.subr.bf16.mxu0 0
        %570 = vmatpush1.bf16.msra.mxu0 0
        %571 = vmatprep.subr.bf16.mxu0 0
        %572 = vmatpush1.bf16.msra.mxu0 0
        %573 = vmatprep.subr.bf16.mxu0 0
        %574 = vmatpush1.bf16.msra.mxu0 0
        %575 = vmatprep.subr.bf16.mxu0 0
        %576 = vmatpush1.bf16.msra.mxu0 0
        %577 = vmatprep.subr.bf16.mxu0 0
        %578 = vmatpush1.bf16.msra.mxu0 0
        %579 = vmatprep.subr.bf16.mxu0 0
        %580 = vmatpush1.bf16.msra.mxu0 0
        %581 = vmatprep.subr.bf16.mxu0 0
        %582 = vmatpush1.bf16.msra.mxu0 0
        %583 = vmatprep.subr.bf16.mxu0 0
        %584 = vmatpush1.bf16.msra.mxu0 0
        %585 = vmatprep.subr.bf16.mxu0 0
        %586 = vmatpush1.bf16.msra.mxu0 0
        %587 = vmatprep.subr.bf16.mxu0 0
        %588 = vmatpush1.bf16.msra.mxu0 0
        %589 = vmatprep.subr.bf16.mxu0 0
        %590 = vmatpush1.bf16.msra.mxu0 0
        %591 = vmatprep.subr.bf16.mxu0 0
        %592 = vmatpush1.bf16.msra.mxu0 0
        %593 = vmatprep.subr.bf16.mxu0 0
        %594 = vmatpush1.bf16.msra.mxu0 0
        %595 = vmatprep.subr.bf16.mxu0 0
        %596 = vmatpush1.bf16.msra.mxu0 0
        %597 = vmatprep.mubr.bf16.mxu0 0
        %598 = vmatmul.mubr.bf16.gmra.mrb[0].mxu0 %v542
        %v599 = vpop.f32.mrb[0].mxu0
        %v600 = vadd.f32 0.0, %v599
        %v601 = vpop.f32.mrb[0].mxu0
        %v602 = vadd.f32 0.0, %v601
        %v603 = vpop.f32.mrb[0].mxu0
        %v604 = vadd.f32 0.0, %v603
        %v605 = vpop.f32.mrb[0].mxu0
        %v606 = vadd.f32 0.0, %v605
        %607 = vmatprep.mubr.bf16.mxu0 0
        %608 = vmatmul.mubr.bf16.gmra.mrb[0].mxu0 %v545
        %v609 = vpop.f32.mrb[0].mxu0
        %v610 = vadd.f32 0.0, %v609
        %v611 = vpop.f32.mrb[0].mxu0
        %v612 = vadd.f32 0.0, %v611
        %v613 = vpop.f32.mrb[0].mxu0
        %v614 = vadd.f32 0.0, %v613
        %v615 = vpop.f32.mrb[0].mxu0
        %v616 = vadd.f32 0.0, %v615
        %617 = vmatprep.mubr.bf16.mxu0 0
        %618 = vmatmul.mubr.bf16.gmra.mrb[0].mxu0 %v548
        %v619 = vpop.f32.mrb[0].mxu0
        %v620 = vadd.f32 0.0, %v619
        %v621 = vpop.f32.mrb[0].mxu0
        %v622 = vadd.f32 0.0, %v621
        %v623 = vpop.f32.mrb[0].mxu0
        %v624 = vadd.f32 0.0, %v623
        %v625 = vpop.f32.mrb[0].mxu0
        %v626 = vadd.f32 0.0, %v625
        %627 = vmatprep.mubr.bf16.mxu0 0
        %628 = vmatmul.mubr.bf16.gmra.mrb[0].mxu0 %v551
        %v629 = vpop.f32.mrb[0].mxu0
        %v630 = vadd.f32 0.0, %v629
        %v631 = vpop.f32.mrb[0].mxu0
        %v632 = vadd.f32 0.0, %v631
        %v633 = vpop.f32.mrb[0].mxu0
        %v634 = vadd.f32 0.0, %v633
        %v635 = vpop.f32.mrb[0].mxu0
        %v636 = vadd.f32 0.0, %v635
        %637 = vmatprep.mubr.bf16.mxu0 0
        %638 = vmatmul.mubr.bf16.gmra.mrb[0].mxu0 %v554
        %v639 = vpop.f32.mrb[0].mxu0
        %v640 = vadd.f32 0.0, %v639
        %v641 = vpop.f32.mrb[0].mxu0
        %v642 = vadd.f32 0.0, %v641
        %v643 = vpop.f32.mrb[0].mxu0
        %v644 = vadd.f32 0.0, %v643
        %v645 = vpop.f32.mrb[0].mxu0
        %v646 = vadd.f32 0.0, %v645
        %647 = vmatprep.mubr.bf16.mxu0 0
        %648 = vmatmul.mubr.bf16.gmra.mrb[0].mxu0 %v557
        %v649 = vpop.f32.mrb[0].mxu0
        %v650 = vadd.f32 0.0, %v649
        %v651 = vpop.f32.mrb[0].mxu0
        %v652 = vadd.f32 0.0, %v651
        %v653 = vpop.f32.mrb[0].mxu0
        %v654 = vadd.f32 0.0, %v653
        %v655 = vpop.f32.mrb[0].mxu0
        %v656 = vadd.f32 0.0, %v655
        %657 = vmatprep.mubr.bf16.mxu0 0
        %658 = vmatmul.mubr.bf16.gmra.mrb[0].mxu0 %v560
        %v659 = vpop.f32.mrb[0].mxu0
        %v660 = vadd.f32 0.0, %v659
        %v661 = vpop.f32.mrb[0].mxu0
        %v662 = vadd.f32 0.0, %v661
        %v663 = vpop.f32.mrb[0].mxu0
        %v664 = vadd.f32 0.0, %v663
        %v665 = vpop.f32.mrb[0].mxu0
        %v666 = vadd.f32 0.0, %v665
        %667 = vmatprep.mubr.bf16.mxu0 0
        %668 = vmatmul.mubr.bf16.gmra.mrb[0].mxu0 %v563
        %v669 = vpop.f32.mrb[0].mxu0
        %v670 = vadd.f32 0.0, %v669
        %v671 = vpop.f32.mrb[0].mxu0
        %v672 = vadd.f32 0.0, %v671
        %v673 = vpop.f32.mrb[0].mxu0
        %v674 = vadd.f32 0.0, %v673
        %v675 = vpop.f32.mrb[0].mxu0
        %v676 = vadd.f32 0.0, %v675
        %677 = vdwg.mxu0
        %v678 = vmax.f32 %v463, %v600
        %v679 = vmax.f32 %v465, %v602
        %v680 = vmax.f32 %v467, %v604
        %v681 = vmax.f32 %v469, %v606
        %v682 = vmax.f32 %v473, %v610
        %v683 = vmax.f32 %v475, %v612
        %v684 = vmax.f32 %v477, %v614
        %v685 = vmax.f32 %v479, %v616
        %v686 = vmax.f32 %v483, %v620
        %v687 = vmax.f32 %v485, %v622
        %v688 = vmax.f32 %v487, %v624
        %v689 = vmax.f32 %v489, %v626
        %v690 = vmax.f32 %v493, %v630
        %v691 = vmax.f32 %v495, %v632
        %v692 = vmax.f32 %v497, %v634
        %v693 = vmax.f32 %v499, %v636
        %v694 = vmax.f32 %v503, %v640
        %v695 = vmax.f32 %v505, %v642
        %v696 = vmax.f32 %v507, %v644
        %v697 = vmax.f32 %v509, %v646
        %v698 = vmax.f32 %v513, %v650
        %v699 = vmax.f32 %v515, %v652
        %v700 = vmax.f32 %v517, %v654
        %v701 = vmax.f32 %v519, %v656
        %v702 = vmax.f32 %v523, %v660
        %v703 = vmax.f32 %v525, %v662
        %v704 = vmax.f32 %v527, %v664
        %v705 = vmax.f32 %v529, %v666
        %v706 = vmax.f32 %v533, %v670
        %v707 = vmax.f32 %v535, %v672
        %v708 = vmax.f32 %v537, %v674
        %v709 = vmax.f32 %v539, %v676
        %v710 = vmax.f32 %v678, %v680
        %v711 = vmax.f32 %v679, %v681
        %v712 = vmax.f32 %v682, %v684
        %v713 = vmax.f32 %v683, %v685
        %v714 = vmax.f32 %v686, %v688
        %v715 = vmax.f32 %v687, %v689
        %v716 = vmax.f32 %v690, %v692
        %v717 = vmax.f32 %v691, %v693
        %v718 = vmax.f32 %v694, %v696
        %v719 = vmax.f32 %v695, %v697
        %v720 = vmax.f32 %v698, %v700
        %v721 = vmax.f32 %v699, %v701
        %v722 = vmax.f32 %v702, %v704
        %v723 = vmax.f32 %v703, %v705
        %v724 = vmax.f32 %v706, %v708
        %v725 = vmax.f32 %v707, %v709
        %v726 = vld [vmem:[%s4] sm:$0x3]
        %v728 = vlaneseq
        %v729 = vshrl.u32 %v728, 7
        %v730 = vsub.s32 0, %v729
        %v731 = vrot.slane %v726, %v730
        %v732 = vlaneseq
        %v733 = vshrl.u32 %v732, 7
        %v734 = vsub.s32 1, %v733
        %v735 = vrot.slane %v726, %v734
        %v738 = vadd.f32 %v710, %v731
        %v739 = vadd.f32 %v711, %v735
        %v740 = vadd.f32 %v712, %v731
        %v741 = vadd.f32 %v713, %v735
        %v742 = vadd.f32 %v714, %v731
        %v743 = vadd.f32 %v715, %v735
        %v744 = vadd.f32 %v716, %v731
        %v745 = vadd.f32 %v717, %v735
        %v746 = vadd.f32 %v718, %v731
        %v747 = vadd.f32 %v719, %v735
        %v748 = vadd.f32 %v720, %v731
        %v749 = vadd.f32 %v721, %v735
        %v750 = vadd.f32 %v722, %v731
        %v751 = vadd.f32 %v723, %v735
        %v752 = vadd.f32 %v724, %v731
        %v753 = vadd.f32 %v725, %v735
        %754 = vxpose.xlu0.b32.start [1/16] %v738, 128
        %755 = vxpose.xlu0.b32.cont [2/16] %v740, 128
        %756 = vxpose.xlu0.b32.cont [3/16] %v742, 128
        %757 = vxpose.xlu0.b32.cont [4/16] %v744, 128
        %758 = vxpose.xlu0.b32.cont [5/16] %v746, 128
        %759 = vxpose.xlu0.b32.cont [6/16] %v748, 128
        %760 = vxpose.xlu0.b32.cont [7/16] %v750, 128
        %761 = vxpose.xlu0.b32.cont [8/16] %v752, 128
        %762 = vxpose.xlu0.b32.cont [9/16] 0.0, 128
        %763 = vxpose.xlu0.b32.cont [10/16] 0.0, 128
        %764 = vxpose.xlu0.b32.cont [11/16] 0.0, 128
        %765 = vxpose.xlu0.b32.cont [12/16] 0.0, 128
        %766 = vxpose.xlu0.b32.cont [13/16] 0.0, 128
        %767 = vxpose.xlu0.b32.cont [14/16] 0.0, 128
        %768 = vxpose.xlu0.b32.cont [15/16] 0.0, 128
        %769 = vxpose.xlu0.b32.end [16/16] 0.0, 128
        %v770 = vpop.trf.xlu0
        %v771 = vpop.trf.xlu0
        %v772 = vpop.trf.xlu0
        %v773 = vpop.trf.xlu0
        %v774 = vpop.trf.xlu0
        %v775 = vpop.trf.xlu0
        %v776 = vpop.trf.xlu0
        %v777 = vpop.trf.xlu0
        %v778 = vpop.trf.xlu0
        %v779 = vpop.trf.xlu0
        %v780 = vpop.trf.xlu0
        %v781 = vpop.trf.xlu0
        %v782 = vpop.trf.xlu0
        %v783 = vpop.trf.xlu0
        %v784 = vpop.trf.xlu0
        %v785 = vpop.trf.xlu0
        %v786 = vpack.c.bf16 %v771, %v770
        %v787 = vpack.c.bf16 %v773, %v772
        %v788 = vpack.c.bf16 %v775, %v774
        %v789 = vpack.c.bf16 %v777, %v776
        %v790 = vpack.c.bf16 %v779, %v778
        %v791 = vpack.c.bf16 %v781, %v780
        %v792 = vpack.c.bf16 %v783, %v782
        %v793 = vpack.c.bf16 %v785, %v784
        %vm794 = vcmask 523264
        %795 = vst.msk [vmem:[#allocation2] sm:$0xff] %vm794, %v786
        %796 = vst.msk [vmem:[#allocation2 + $0x8] sm:$0xff] %vm794, %v787
        %797 = vst.msk [vmem:[#allocation2 + $0x10] sm:$0xff] %vm794, %v788
        %798 = vst.msk [vmem:[#allocation2 + $0x18] sm:$0xff] %vm794, %v789
        %799 = vst.msk [vmem:[#allocation2 + $0x20] sm:$0xff] %vm794, %v790
        %800 = vst.msk [vmem:[#allocation2 + $0x28] sm:$0xff] %vm794, %v791
        %801 = vst.msk [vmem:[#allocation2 + $0x30] sm:$0xff] %vm794, %v792
        %802 = vst.msk [vmem:[#allocation2 + $0x38] sm:$0xff] %vm794, %v793
        %v803 = vpack.c.bf16 %v741, %v739
        %v804 = vpack.c.bf16 %v745, %v743
        %v805 = vpack.c.bf16 %v749, %v747
        %v806 = vpack.c.bf16 %v753, %v751
        %807 = vst [vmem:[#allocation3] sm:$0xff] %v803
        %808 = vst [vmem:[#allocation3 + $0x8] sm:$0xff] %v804
        %809 = vst [vmem:[#allocation3 + $0x10] sm:$0xff] %v805
        %810 = vst [vmem:[#allocation3 + $0x18] sm:$0xff] %v806
      $region52: #{nonlocal_block.1} parent=47 // pred_fallthru
        _
      %s811 = smul.u32 %s23, 128
      %s812 = scalar_lea.vmem %s291, %s811
      %v813 = vld [vmem:[%s812] sm:$0xff]
      %v814 = vld [vmem:[%s812 + $0x8] sm:$0xff]
      %v815 = vld [vmem:[%s812 + $0x10] sm:$0xff]
      %v816 = vld [vmem:[%s812 + $0x18] sm:$0xff]
      %v817 = vld [vmem:[%s812 + $0x20] sm:$0xff]
      %v818 = vld [vmem:[%s812 + $0x28] sm:$0xff]
      %v819 = vld [vmem:[%s812 + $0x30] sm:$0xff]
      %v820 = vld [vmem:[%s812 + $0x38] sm:$0xff]
      %v821 = vld [vmem:[%s812 + $0x40] sm:$0xff]
      %v822 = vld [vmem:[%s812 + $0x48] sm:$0xff]
      %v823 = vld [vmem:[%s812 + $0x50] sm:$0xff]
      %v824 = vld [vmem:[%s812 + $0x58] sm:$0xff]
      %v825 = vld [vmem:[%s812 + $0x60] sm:$0xff]
      %v826 = vld [vmem:[%s812 + $0x68] sm:$0xff]
      %v827 = vld [vmem:[%s812 + $0x70] sm:$0xff]
      %v828 = vld [vmem:[%s812 + $0x78] sm:$0xff]
      %v829 = vpack.c.bf16 %v814, %v813
      %v830 = vpack.c.bf16 %v816, %v815
      %v831 = vpack.c.bf16 %v818, %v817
      %v832 = vpack.c.bf16 %v820, %v819
      %v833 = vpack.c.bf16 %v822, %v821
      %v834 = vpack.c.bf16 %v824, %v823
      %v835 = vpack.c.bf16 %v826, %v825
      %v836 = vpack.c.bf16 %v828, %v827
      %v837 = vld [vmem:[%s1] sm:$0x3]
      %v838 = vld [vmem:[%s2] sm:$0x1]
      %v840 = vlaneseq
      %v841 = vshrl.u32 %v840, 7
      %v842 = vsub.s32 0, %v841
      %v843 = vrot.slane %v838, %v842
      %vm845 = vcmask 31744
      %v847 = vsel %vm845, %v829, 0
      %v850 = vsel %vm845, %v830, 0
      %v853 = vsel %vm845, %v831, 0
      %v856 = vsel %vm845, %v832, 0
      %v859 = vsel %vm845, %v833, 0
      %v862 = vsel %vm845, %v834, 0
      %v865 = vsel %vm845, %v835, 0
      %v868 = vsel %vm845, %v836, 0
      %vm870 = vcmask 1041408
      %v872 = vsel %vm870, %v837, 0
      %874 = vmatprep.subr.bf16.mxu0 0
      %875 = vmatpush1.bf16.msra.mxu0 %v872
      %876 = vmatprep.subr.bf16.mxu0 0
      %877 = vmatpush1.bf16.msra.mxu0 0
      %878 = vmatprep.subr.bf16.mxu0 0
      %879 = vmatpush1.bf16.msra.mxu0 0
      %880 = vmatprep.subr.bf16.mxu0 0
      %881 = vmatpush1.bf16.msra.mxu0 0
      %882 = vmatprep.subr.bf16.mxu0 0
      %883 = vmatpush1.bf16.msra.mxu0 0
      %884 = vmatprep.subr.bf16.mxu0 0
      %885 = vmatpush1.bf16.msra.mxu0 0
      %886 = vmatprep.subr.bf16.mxu0 0
      %887 = vmatpush1.bf16.msra.mxu0 0
      %888 = vmatprep.subr.bf16.mxu0 0
      %889 = vmatpush1.bf16.msra.mxu0 0
      %890 = vmatprep.subr.bf16.mxu0 0
      %891 = vmatpush1.bf16.msra.mxu0 0
      %892 = vmatprep.subr.bf16.mxu0 0
      %893 = vmatpush1.bf16.msra.mxu0 0
      %894 = vmatprep.subr.bf16.mxu0 0
      %895 = vmatpush1.bf16.msra.mxu0 0
      %896 = vmatprep.subr.bf16.mxu0 0
      %897 = vmatpush1.bf16.msra.mxu0 0
      %898 = vmatprep.subr.bf16.mxu0 0
      %899 = vmatpush1.bf16.msra.mxu0 0
      %900 = vmatprep.subr.bf16.mxu0 0
      %901 = vmatpush1.bf16.msra.mxu0 0
      %902 = vmatprep.subr.bf16.mxu0 0
      %903 = vmatpush1.bf16.msra.mxu0 0
      %904 = vmatprep.subr.bf16.mxu0 0
      %905 = vmatpush1.bf16.msra.mxu0 0
      %906 = vmatprep.mubr.bf16.mxu0 0
      %907 = vmatmul.mubr.bf16.gmra.mrb[0].mxu0 %v847
      %v908 = vpop.f32.mrb[0].mxu0
      %v909 = vadd.f32 %v843, %v908
      %v910 = vpop.f32.mrb[0].mxu0
      %v911 = vpop.f32.mrb[0].mxu0
      %v912 = vadd.f32 %v843, %v911
      %v913 = vpop.f32.mrb[0].mxu0
      %914 = vmatprep.mubr.bf16.mxu0 0
      %915 = vmatmul.mubr.bf16.gmra.mrb[0].mxu0 %v850
      %v916 = vpop.f32.mrb[0].mxu0
      %v917 = vadd.f32 %v843, %v916
      %v918 = vpop.f32.mrb[0].mxu0
      %v919 = vpop.f32.mrb[0].mxu0
      %v920 = vadd.f32 %v843, %v919
      %v921 = vpop.f32.mrb[0].mxu0
      %922 = vmatprep.mubr.bf16.mxu0 0
      %923 = vmatmul.mubr.bf16.gmra.mrb[0].mxu0 %v853
      %v924 = vpop.f32.mrb[0].mxu0
      %v925 = vadd.f32 %v843, %v924
      %v926 = vpop.f32.mrb[0].mxu0
      %v927 = vpop.f32.mrb[0].mxu0
      %v928 = vadd.f32 %v843, %v927
      %v929 = vpop.f32.mrb[0].mxu0
      %930 = vmatprep.mubr.bf16.mxu0 0
      %931 = vmatmul.mubr.bf16.gmra.mrb[0].mxu0 %v856
      %v932 = vpop.f32.mrb[0].mxu0
      %v933 = vadd.f32 %v843, %v932
      %v934 = vpop.f32.mrb[0].mxu0
      %v935 = vpop.f32.mrb[0].mxu0
      %v936 = vadd.f32 %v843, %v935
      %v937 = vpop.f32.mrb[0].mxu0
      %938 = vmatprep.mubr.bf16.mxu0 0
      %939 = vmatmul.mubr.bf16.gmra.mrb[0].mxu0 %v859
      %v940 = vpop.f32.mrb[0].mxu0
      %v941 = vadd.f32 %v843, %v940
      %v942 = vpop.f32.mrb[0].mxu0
      %v943 = vpop.f32.mrb[0].mxu0
      %v944 = vadd.f32 %v843, %v943
      %v945 = vpop.f32.mrb[0].mxu0
      %946 = vmatprep.mubr.bf16.mxu0 0
      %947 = vmatmul.mubr.bf16.gmra.mrb[0].mxu0 %v862
      %v948 = vpop.f32.mrb[0].mxu0
      %v949 = vadd.f32 %v843, %v948
      %v950 = vpop.f32.mrb[0].mxu0
      %v951 = vpop.f32.mrb[0].mxu0
      %v952 = vadd.f32 %v843, %v951
      %v953 = vpop.f32.mrb[0].mxu0
      %954 = vmatprep.mubr.bf16.mxu0 0
      %955 = vmatmul.mubr.bf16.gmra.mrb[0].mxu0 %v865
      %v956 = vpop.f32.mrb[0].mxu0
      %v957 = vadd.f32 %v843, %v956
      %v958 = vpop.f32.mrb[0].mxu0
      %v959 = vpop.f32.mrb[0].mxu0
      %v960 = vadd.f32 %v843, %v959
      %v961 = vpop.f32.mrb[0].mxu0
      %962 = vmatprep.mubr.bf16.mxu0 0
      %963 = vmatmul.mubr.bf16.gmra.mrb[0].mxu0 %v868
      %v964 = vpop.f32.mrb[0].mxu0
      %v965 = vadd.f32 %v843, %v964
      %v966 = vpop.f32.mrb[0].mxu0
      %v967 = vpop.f32.mrb[0].mxu0
      %v968 = vadd.f32 %v843, %v967
      %v969 = vpop.f32.mrb[0].mxu0
      %970 = vdwg.mxu0
      %v971 = vpack.c.bf16 %v912, %v909
      %v972 = vpack.c.bf16 %v920, %v917
      %v973 = vpack.c.bf16 %v928, %v925
      %v974 = vpack.c.bf16 %v936, %v933
      %v975 = vpack.c.bf16 %v944, %v941
      %v976 = vpack.c.bf16 %v952, %v949
      %v977 = vpack.c.bf16 %v960, %v957
      %v978 = vpack.c.bf16 %v968, %v965
      %v979 = vld [vmem:[#allocation2] sm:$0xff]
      %v980 = vld [vmem:[#allocation2 + $0x8] sm:$0xff]
      %v981 = vld [vmem:[#allocation2 + $0x10] sm:$0xff]
      %v982 = vld [vmem:[#allocation2 + $0x18] sm:$0xff]
      %v983 = vld [vmem:[#allocation2 + $0x20] sm:$0xff]
      %v984 = vld [vmem:[#allocation2 + $0x28] sm:$0xff]
      %v985 = vld [vmem:[#allocation2 + $0x30] sm:$0xff]
      %v986 = vld [vmem:[#allocation2 + $0x38] sm:$0xff]
      %987 = vmatprep.subr.bf16.mxu0 0
      %988 = vmatpush1.bf16.msra.mxu0 %v979
      %989 = vmatprep.subr.bf16.mxu0 0
      %990 = vmatpush1.bf16.msra.mxu0 %v980
      %991 = vmatprep.subr.bf16.mxu0 0
      %992 = vmatpush1.bf16.msra.mxu0 %v981
      %993 = vmatprep.subr.bf16.mxu0 0
      %994 = vmatpush1.bf16.msra.mxu0 %v982
      %995 = vmatprep.subr.bf16.mxu0 0
      %996 = vmatpush1.bf16.msra.mxu0 %v983
      %997 = vmatprep.subr.bf16.mxu0 0
      %998 = vmatpush1.bf16.msra.mxu0 %v984
      %999 = vmatprep.subr.bf16.mxu0 0
      %1000 = vmatpush1.bf16.msra.mxu0 %v985
      %1001 = vmatprep.subr.bf16.mxu0 0
      %1002 = vmatpush1.bf16.msra.mxu0 %v986
      %1003 = vmatprep.subr.bf16.mxu0 0
      %1004 = vmatpush1.bf16.msra.mxu0 0
      %1005 = vmatprep.subr.bf16.mxu0 0
      %1006 = vmatpush1.bf16.msra.mxu0 0
      %1007 = vmatprep.subr.bf16.mxu0 0
      %1008 = vmatpush1.bf16.msra.mxu0 0
      %1009 = vmatprep.subr.bf16.mxu0 0
      %1010 = vmatpush1.bf16.msra.mxu0 0
      %1011 = vmatprep.subr.bf16.mxu0 0
      %1012 = vmatpush1.bf16.msra.mxu0 0
      %1013 = vmatprep.subr.bf16.mxu0 0
      %1014 = vmatpush1.bf16.msra.mxu0 0
      %1015 = vmatprep.subr.bf16.mxu0 0
      %1016 = vmatpush1.bf16.msra.mxu0 0
      %1017 = vmatprep.subr.bf16.mxu0 0
      %1018 = vmatpush1.bf16.msra.mxu0 0
      %1019 = vmatprep.mubr.bf16.mxu0 0
      %1020 = vmatmul.mubr.bf16.gmra.mrb[0].mxu0 %v971
      %v1021 = vpop.f32.mrb[0].mxu0
      %v1022 = vadd.f32 0.0, %v1021
      %v1023 = vpop.f32.mrb[0].mxu0
      %v1024 = vpop.f32.mrb[0].mxu0
      %v1025 = vadd.f32 0.0, %v1024
      %v1026 = vpop.f32.mrb[0].mxu0
      %1027 = vmatprep.mubr.bf16.mxu0 0
      %1028 = vmatmul.mubr.bf16.gmra.mrb[0].mxu0 %v972
      %v1029 = vpop.f32.mrb[0].mxu0
      %v1030 = vadd.f32 0.0, %v1029
      %v1031 = vpop.f32.mrb[0].mxu0
      %v1032 = vpop.f32.mrb[0].mxu0
      %v1033 = vadd.f32 0.0, %v1032
      %v1034 = vpop.f32.mrb[0].mxu0
      %1035 = vmatprep.mubr.bf16.mxu0 0
      %1036 = vmatmul.mubr.bf16.gmra.mrb[0].mxu0 %v973
      %v1037 = vpop.f32.mrb[0].mxu0
      %v1038 = vadd.f32 0.0, %v1037
      %v1039 = vpop.f32.mrb[0].mxu0
      %v1040 = vpop.f32.mrb[0].mxu0
      %v1041 = vadd.f32 0.0, %v1040
      %v1042 = vpop.f32.mrb[0].mxu0
      %1043 = vmatprep.mubr.bf16.mxu0 0
      %1044 = vmatmul.mubr.bf16.gmra.mrb[0].mxu0 %v974
      %v1045 = vpop.f32.mrb[0].mxu0
      %v1046 = vadd.f32 0.0, %v1045
      %v1047 = vpop.f32.mrb[0].mxu0
      %v1048 = vpop.f32.mrb[0].mxu0
      %v1049 = vadd.f32 0.0, %v1048
      %v1050 = vpop.f32.mrb[0].mxu0
      %1051 = vmatprep.mubr.bf16.mxu0 0
      %1052 = vmatmul.mubr.bf16.gmra.mrb[0].mxu0 %v975
      %v1053 = vpop.f32.mrb[0].mxu0
      %v1054 = vadd.f32 0.0, %v1053
      %v1055 = vpop.f32.mrb[0].mxu0
      %v1056 = vpop.f32.mrb[0].mxu0
      %v1057 = vadd.f32 0.0, %v1056
      %v1058 = vpop.f32.mrb[0].mxu0
      %1059 = vmatprep.mubr.bf16.mxu0 0
      %1060 = vmatmul.mubr.bf16.gmra.mrb[0].mxu0 %v976
      %v1061 = vpop.f32.mrb[0].mxu0
      %v1062 = vadd.f32 0.0, %v1061
      %v1063 = vpop.f32.mrb[0].mxu0
      %v1064 = vpop.f32.mrb[0].mxu0
      %v1065 = vadd.f32 0.0, %v1064
      %v1066 = vpop.f32.mrb[0].mxu0
      %1067 = vmatprep.mubr.bf16.mxu0 0
      %1068 = vmatmul.mubr.bf16.gmra.mrb[0].mxu0 %v977
      %v1069 = vpop.f32.mrb[0].mxu0
      %v1070 = vadd.f32 0.0, %v1069
      %v1071 = vpop.f32.mrb[0].mxu0
      %v1072 = vpop.f32.mrb[0].mxu0
      %v1073 = vadd.f32 0.0, %v1072
      %v1074 = vpop.f32.mrb[0].mxu0
      %1075 = vmatprep.mubr.bf16.mxu0 0
      %1076 = vmatmul.mubr.bf16.gmra.mrb[0].mxu0 %v978
      %v1077 = vpop.f32.mrb[0].mxu0
      %v1078 = vadd.f32 0.0, %v1077
      %v1079 = vpop.f32.mrb[0].mxu0
      %v1080 = vpop.f32.mrb[0].mxu0
      %v1081 = vadd.f32 0.0, %v1080
      %v1082 = vpop.f32.mrb[0].mxu0
      %1083 = vdwg.mxu0
      %vm1084 = vcmask 523264
      %v1085 = vsel %vm1084, %v1022, -inf
      %1086 = vmax.xlane.f32.xlu0 %v1085
      %v1087 = vpop.xlane.xlu0 %1086
      %v1088 = vsel %vm1084, %v1025, -inf
      %1089 = vmax.xlane.f32.xlu0 %v1088
      %v1090 = vpop.xlane.xlu0 %1089
      %v1091 = vsel %vm1084, %v1030, -inf
      %1092 = vmax.xlane.f32.xlu0 %v1091
      %v1093 = vpop.xlane.xlu0 %1092
      %v1094 = vsel %vm1084, %v1033, -inf
      %1095 = vmax.xlane.f32.xlu0 %v1094
      %v1096 = vpop.xlane.xlu0 %1095
      %v1097 = vsel %vm1084, %v1038, -inf
      %1098 = vmax.xlane.f32.xlu0 %v1097
      %v1099 = vpop.xlane.xlu0 %1098
      %v1100 = vsel %vm1084, %v1041, -inf
      %1101 = vmax.xlane.f32.xlu0 %v1100
      %v1102 = vpop.xlane.xlu0 %1101
      %v1103 = vsel %vm1084, %v1046, -inf
      %1104 = vmax.xlane.f32.xlu0 %v1103
      %v1105 = vpop.xlane.xlu0 %1104
      %v1106 = vsel %vm1084, %v1049, -inf
      %1107 = vmax.xlane.f32.xlu0 %v1106
      %v1108 = vpop.xlane.xlu0 %1107
      %v1109 = vsel %vm1084, %v1054, -inf
      %1110 = vmax.xlane.f32.xlu0 %v1109
      %v1111 = vpop.xlane.xlu0 %1110
      %v1112 = vsel %vm1084, %v1057, -inf
      %1113 = vmax.xlane.f32.xlu0 %v1112
      %v1114 = vpop.xlane.xlu0 %1113
      %v1115 = vsel %vm1084, %v1062, -inf
      %1116 = vmax.xlane.f32.xlu0 %v1115
      %v1117 = vpop.xlane.xlu0 %1116
      %v1118 = vsel %vm1084, %v1065, -inf
      %1119 = vmax.xlane.f32.xlu0 %v1118
      %v1120 = vpop.xlane.xlu0 %1119
      %v1121 = vsel %vm1084, %v1070, -inf
      %1122 = vmax.xlane.f32.xlu0 %v1121
      %v1123 = vpop.xlane.xlu0 %1122
      %v1124 = vsel %vm1084, %v1073, -inf
      %1125 = vmax.xlane.f32.xlu0 %v1124
      %v1126 = vpop.xlane.xlu0 %1125
      %v1127 = vsel %vm1084, %v1078, -inf
      %1128 = vmax.xlane.f32.xlu0 %v1127
      %v1129 = vpop.xlane.xlu0 %1128
      %v1130 = vsel %vm1084, %v1081, -inf
      %1131 = vmax.xlane.f32.xlu0 %v1130
      %v1132 = vpop.xlane.xlu0 %1131
      %v1133 = vsub.f32 %v1022, %v1087
      %v1134 = vsub.f32 %v1025, %v1090
      %v1135 = vsub.f32 %v1030, %v1093
      %v1136 = vsub.f32 %v1033, %v1096
      %v1137 = vsub.f32 %v1038, %v1099
      %v1138 = vsub.f32 %v1041, %v1102
      %v1139 = vsub.f32 %v1046, %v1105
      %v1140 = vsub.f32 %v1049, %v1108
      %v1141 = vsub.f32 %v1054, %v1111
      %v1142 = vsub.f32 %v1057, %v1114
      %v1143 = vsub.f32 %v1062, %v1117
      %v1144 = vsub.f32 %v1065, %v1120
      %v1145 = vsub.f32 %v1070, %v1123
      %v1146 = vsub.f32 %v1073, %v1126
      %v1147 = vsub.f32 %v1078, %v1129
      %v1148 = vsub.f32 %v1081, %v1132
      %v1149 = vmul.f32 %v1133, 1.442695
      %v1150 = vpow.pop %v1149
      %v1151 = vmul.f32 %v1134, 1.442695
      %v1152 = vpow.pop %v1151
      %v1153 = vmul.f32 %v1135, 1.442695
      %v1154 = vpow.pop %v1153
      %v1155 = vmul.f32 %v1136, 1.442695
      %v1156 = vpow.pop %v1155
      %v1157 = vmul.f32 %v1137, 1.442695
      %v1158 = vpow.pop %v1157
      %v1159 = vmul.f32 %v1138, 1.442695
      %v1160 = vpow.pop %v1159
      %v1161 = vmul.f32 %v1139, 1.442695
      %v1162 = vpow.pop %v1161
      %v1163 = vmul.f32 %v1140, 1.442695
      %v1164 = vpow.pop %v1163
      %v1165 = vmul.f32 %v1141, 1.442695
      %v1166 = vpow.pop %v1165
      %v1167 = vmul.f32 %v1142, 1.442695
      %v1168 = vpow.pop %v1167
      %v1169 = vmul.f32 %v1143, 1.442695
      %v1170 = vpow.pop %v1169
      %v1171 = vmul.f32 %v1144, 1.442695
      %v1172 = vpow.pop %v1171
      %v1173 = vmul.f32 %v1145, 1.442695
      %v1174 = vpow.pop %v1173
      %v1175 = vmul.f32 %v1146, 1.442695
      %v1176 = vpow.pop %v1175
      %v1177 = vmul.f32 %v1147, 1.442695
      %v1178 = vpow.pop %v1177
      %v1179 = vmul.f32 %v1148, 1.442695
      %v1180 = vpow.pop %v1179
      %v1181 = vsel %vm1084, %v1150, 0.0
      %1182 = vadd.xlane.f32.xlu0 %v1181
      %v1183 = vpop.xlane.xlu0 %1182
      %v1184 = vsel %vm1084, %v1152, 0.0
      %1185 = vadd.xlane.f32.xlu0 %v1184
      %v1186 = vpop.xlane.xlu0 %1185
      %v1187 = vsel %vm1084, %v1154, 0.0
      %1188 = vadd.xlane.f32.xlu0 %v1187
      %v1189 = vpop.xlane.xlu0 %1188
      %v1190 = vsel %vm1084, %v1156, 0.0
      %1191 = vadd.xlane.f32.xlu0 %v1190
      %v1192 = vpop.xlane.xlu0 %1191
      %v1193 = vsel %vm1084, %v1158, 0.0
      %1194 = vadd.xlane.f32.xlu0 %v1193
      %v1195 = vpop.xlane.xlu0 %1194
      %v1196 = vsel %vm1084, %v1160, 0.0
      %1197 = vadd.xlane.f32.xlu0 %v1196
      %v1198 = vpop.xlane.xlu0 %1197
      %v1199 = vsel %vm1084, %v1162, 0.0
      %1200 = vadd.xlane.f32.xlu0 %v1199
      %v1201 = vpop.xlane.xlu0 %1200
      %v1202 = vsel %vm1084, %v1164, 0.0
      %1203 = vadd.xlane.f32.xlu0 %v1202
      %v1204 = vpop.xlane.xlu0 %1203
      %v1205 = vsel %vm1084, %v1166, 0.0
      %1206 = vadd.xlane.f32.xlu0 %v1205
      %v1207 = vpop.xlane.xlu0 %1206
      %v1208 = vsel %vm1084, %v1168, 0.0
      %1209 = vadd.xlane.f32.xlu0 %v1208
      %v1210 = vpop.xlane.xlu0 %1209
      %v1211 = vsel %vm1084, %v1170, 0.0
      %1212 = vadd.xlane.f32.xlu0 %v1211
      %v1213 = vpop.xlane.xlu0 %1212
      %v1214 = vsel %vm1084, %v1172, 0.0
      %1215 = vadd.xlane.f32.xlu0 %v1214
      %v1216 = vpop.xlane.xlu0 %1215
      %v1217 = vsel %vm1084, %v1174, 0.0
      %1218 = vadd.xlane.f32.xlu0 %v1217
      %v1219 = vpop.xlane.xlu0 %1218
      %v1220 = vsel %vm1084, %v1176, 0.0
      %1221 = vadd.xlane.f32.xlu0 %v1220
      %v1222 = vpop.xlane.xlu0 %1221
      %v1223 = vsel %vm1084, %v1178, 0.0
      %1224 = vadd.xlane.f32.xlu0 %v1223
      %v1225 = vpop.xlane.xlu0 %1224
      %v1226 = vsel %vm1084, %v1180, 0.0
      %1227 = vadd.xlane.f32.xlu0 %v1226
      %v1228 = vpop.xlane.xlu0 %1227
      %v1229 = vpack.c.bf16 %v1152, %v1150
      %v1230 = vpack.c.bf16 %v1156, %v1154
      %v1231 = vpack.c.bf16 %v1160, %v1158
      %v1232 = vpack.c.bf16 %v1164, %v1162
      %v1233 = vpack.c.bf16 %v1168, %v1166
      %v1234 = vpack.c.bf16 %v1172, %v1170
      %v1235 = vpack.c.bf16 %v1176, %v1174
      %v1236 = vpack.c.bf16 %v1180, %v1178
      %v1237 = vld [vmem:[#allocation3] sm:$0xff]
      %v1238 = vld [vmem:[#allocation3 + $0x8] sm:$0xff]
      %v1239 = vld [vmem:[#allocation3 + $0x10] sm:$0xff]
      %v1240 = vld [vmem:[#allocation3 + $0x18] sm:$0xff]
      %v1242 = vsel %vm1084, %v1229, 0
      %v1245 = vsel %vm1084, %v1230, 0
      %v1248 = vsel %vm1084, %v1231, 0
      %v1251 = vsel %vm1084, %v1232, 0
      %v1254 = vsel %vm1084, %v1233, 0
      %v1257 = vsel %vm1084, %v1234, 0
      %v1260 = vsel %vm1084, %v1235, 0
      %v1263 = vsel %vm1084, %v1236, 0
      %1265 = vmatprep.subr.bf16.mxu0 0
      %1266 = vmatpush1.bf16.msra.mxu0 %v1237
      %1267 = vmatprep.subr.bf16.mxu0 0
      %1268 = vmatpush1.bf16.msra.mxu0 %v1238
      %1269 = vmatprep.subr.bf16.mxu0 0
      %1270 = vmatpush1.bf16.msra.mxu0 %v1239
      %1271 = vmatprep.subr.bf16.mxu0 0
      %1272 = vmatpush1.bf16.msra.mxu0 %v1240
      %1273 = vmatprep.subr.bf16.mxu0 0
      %1274 = vmatpush1.bf16.msra.mxu0 0
      %1275 = vmatprep.subr.bf16.mxu0 0
      %1276 = vmatpush1.bf16.msra.mxu0 0
      %1277 = vmatprep.subr.bf16.mxu0 0
      %1278 = vmatpush1.bf16.msra.mxu0 0
      %1279 = vmatprep.subr.bf16.mxu0 0
      %1280 = vmatpush1.bf16.msra.mxu0 0
      %1281 = vmatprep.subr.bf16.mxu0 0
      %1282 = vmatpush1.bf16.msra.mxu0 0
      %1283 = vmatprep.subr.bf16.mxu0 0
      %1284 = vmatpush1.bf16.msra.mxu0 0
      %1285 = vmatprep.subr.bf16.mxu0 0
      %1286 = vmatpush1.bf16.msra.mxu0 0
      %1287 = vmatprep.subr.bf16.mxu0 0
      %1288 = vmatpush1.bf16.msra.mxu0 0
      %1289 = vmatprep.subr.bf16.mxu0 0
      %1290 = vmatpush1.bf16.msra.mxu0 0
      %1291 = vmatprep.subr.bf16.mxu0 0
      %1292 = vmatpush1.bf16.msra.mxu0 0
      %1293 = vmatprep.subr.bf16.mxu0 0
      %1294 = vmatpush1.bf16.msra.mxu0 0
      %1295 = vmatprep.subr.bf16.mxu0 0
      %1296 = vmatpush1.bf16.msra.mxu0 0
      %1297 = vmatprep.mubr.bf16.mxu0 0
      %1298 = vmatmul.mubr.bf16.gmra.mrb[0].mxu0 %v1242
      %v1299 = vpop.f32.mrb[0].mxu0
      %v1300 = vadd.f32 0.0, %v1299
      %v1301 = vpop.f32.mrb[0].mxu0
      %v1302 = vpop.f32.mrb[0].mxu0
      %v1303 = vadd.f32 0.0, %v1302
      %v1304 = vpop.f32.mrb[0].mxu0
      %1305 = vmatprep.mubr.bf16.mxu0 0
      %1306 = vmatmul.mubr.bf16.gmra.mrb[0].mxu0 %v1245
      %v1307 = vpop.f32.mrb[0].mxu0
      %v1308 = vadd.f32 0.0, %v1307
      %v1309 = vpop.f32.mrb[0].mxu0
      %v1310 = vpop.f32.mrb[0].mxu0
      %v1311 = vadd.f32 0.0, %v1310
      %v1312 = vpop.f32.mrb[0].mxu0
      %1313 = vmatprep.mubr.bf16.mxu0 0
      %1314 = vmatmul.mubr.bf16.gmra.mrb[0].mxu0 %v1248
      %v1315 = vpop.f32.mrb[0].mxu0
      %v1316 = vadd.f32 0.0, %v1315
      %v1317 = vpop.f32.mrb[0].mxu0
      %v1318 = vpop.f32.mrb[0].mxu0
      %v1319 = vadd.f32 0.0, %v1318
      %v1320 = vpop.f32.mrb[0].mxu0
      %1321 = vmatprep.mubr.bf16.mxu0 0
      %1322 = vmatmul.mubr.bf16.gmra.mrb[0].mxu0 %v1251
      %v1323 = vpop.f32.mrb[0].mxu0
      %v1324 = vadd.f32 0.0, %v1323
      %v1325 = vpop.f32.mrb[0].mxu0
      %v1326 = vpop.f32.mrb[0].mxu0
      %v1327 = vadd.f32 0.0, %v1326
      %v1328 = vpop.f32.mrb[0].mxu0
      %1329 = vmatprep.mubr.bf16.mxu0 0
      %1330 = vmatmul.mubr.bf16.gmra.mrb[0].mxu0 %v1254
      %v1331 = vpop.f32.mrb[0].mxu0
      %v1332 = vadd.f32 0.0, %v1331
      %v1333 = vpop.f32.mrb[0].mxu0
      %v1334 = vpop.f32.mrb[0].mxu0
      %v1335 = vadd.f32 0.0, %v1334
      %v1336 = vpop.f32.mrb[0].mxu0
      %1337 = vmatprep.mubr.bf16.mxu0 0
      %1338 = vmatmul.mubr.bf16.gmra.mrb[0].mxu0 %v1257
      %v1339 = vpop.f32.mrb[0].mxu0
      %v1340 = vadd.f32 0.0, %v1339
      %v1341 = vpop.f32.mrb[0].mxu0
      %v1342 = vpop.f32.mrb[0].mxu0
      %v1343 = vadd.f32 0.0, %v1342
      %v1344 = vpop.f32.mrb[0].mxu0
      %1345 = vmatprep.mubr.bf16.mxu0 0
      %1346 = vmatmul.mubr.bf16.gmra.mrb[0].mxu0 %v1260
      %v1347 = vpop.f32.mrb[0].mxu0
      %v1348 = vadd.f32 0.0, %v1347
      %v1349 = vpop.f32.mrb[0].mxu0
      %v1350 = vpop.f32.mrb[0].mxu0
      %v1351 = vadd.f32 0.0, %v1350
      %v1352 = vpop.f32.mrb[0].mxu0
      %1353 = vmatprep.mubr.bf16.mxu0 0
      %1354 = vmatmul.mubr.bf16.gmra.mrb[0].mxu0 %v1263
      %v1355 = vpop.f32.mrb[0].mxu0
      %v1356 = vadd.f32 0.0, %v1355
      %v1357 = vpop.f32.mrb[0].mxu0
      %v1358 = vpop.f32.mrb[0].mxu0
      %v1359 = vadd.f32 0.0, %v1358
      %v1360 = vpop.f32.mrb[0].mxu0
      %1361 = vdwg.mxu0
      %v1362 = vrcp.pop %v1183
      %v1363 = vrcp.pop %v1186
      %v1364 = vrcp.pop %v1189
      %v1365 = vrcp.pop %v1192
      %v1366 = vrcp.pop %v1195
      %v1367 = vrcp.pop %v1198
      %v1368 = vrcp.pop %v1201
      %v1369 = vrcp.pop %v1204
      %v1370 = vrcp.pop %v1207
      %v1371 = vrcp.pop %v1210
      %v1372 = vrcp.pop %v1213
      %v1373 = vrcp.pop %v1216
      %v1374 = vrcp.pop %v1219
      %v1375 = vrcp.pop %v1222
      %v1376 = vrcp.pop %v1225
      %v1377 = vrcp.pop %v1228
      %v1378 = vmul.f32 %v1300, %v1362
      %v1379 = vmul.f32 %v1303, %v1363
      %v1380 = vmul.f32 %v1308, %v1364
      %v1381 = vmul.f32 %v1311, %v1365
      %v1382 = vmul.f32 %v1316, %v1366
      %v1383 = vmul.f32 %v1319, %v1367
      %v1384 = vmul.f32 %v1324, %v1368
      %v1385 = vmul.f32 %v1327, %v1369
      %v1386 = vmul.f32 %v1332, %v1370
      %v1387 = vmul.f32 %v1335, %v1371
      %v1388 = vmul.f32 %v1340, %v1372
      %v1389 = vmul.f32 %v1343, %v1373
      %v1390 = vmul.f32 %v1348, %v1374
      %v1391 = vmul.f32 %v1351, %v1375
      %v1392 = vmul.f32 %v1356, %v1376
      %v1393 = vmul.f32 %v1359, %v1377
      %v1394 = vpack.c.bf16 %v1379, %v1378
      %v1395 = vpack.c.bf16 %v1381, %v1380
      %v1396 = vpack.c.bf16 %v1383, %v1382
      %v1397 = vpack.c.bf16 %v1385, %v1384
      %v1398 = vpack.c.bf16 %v1387, %v1386
      %v1399 = vpack.c.bf16 %v1389, %v1388
      %v1400 = vpack.c.bf16 %v1391, %v1390
      %v1401 = vpack.c.bf16 %v1393, %v1392
      %v1402 = vld [vmem:[%s5] sm:$0xf]
      %v1403 = vld [vmem:[%s5 + $0x4] sm:$0xf]
      %v1404 = vld [vmem:[%s5 + $0x8] sm:$0xf]
      %v1405 = vld [vmem:[%s5 + $0xc] sm:$0xf]
      %v1406 = vld [vmem:[%s5 + $0x10] sm:$0xf]
      %v1407 = vld [vmem:[%s5 + $0x14] sm:$0xf]
      %v1408 = vld [vmem:[%s5 + $0x18] sm:$0xf]
      %v1409 = vld [vmem:[%s5 + $0x1c] sm:$0xf]
      %v1410 = vld [vmem:[%s5 + $0x20] sm:$0xf]
      %v1411 = vld [vmem:[%s5 + $0x24] sm:$0xf]
      %v1412 = vld [vmem:[%s5 + $0x28] sm:$0xf]
      %v1413 = vld [vmem:[%s5 + $0x2c] sm:$0xf]
      %v1414 = vld [vmem:[%s5 + $0x30] sm:$0xf]
      %v1415 = vld [vmem:[%s5 + $0x34] sm:$0xf]
      %v1416 = vld [vmem:[%s5 + $0x38] sm:$0xf]
      %v1417 = vld [vmem:[%s5 + $0x3c] sm:$0xf]
      %v1418 = vld [vmem:[%s6] sm:$0x1]
      %v1420 = vlaneseq
      %v1421 = vshrl.u32 %v1420, 7
      %v1422 = vsub.s32 0, %v1421
      %v1423 = vrot.slane %v1418, %v1422
      %v1441 = vunpack.c.l.b16 %v1402
      %v1442 = vunpack.c.l.b16 %v1403
      %v1443 = vunpack.c.l.b16 %v1404
      %v1444 = vunpack.c.l.b16 %v1405
      %v1445 = vunpack.c.l.b16 %v1406
      %v1446 = vunpack.c.l.b16 %v1407
      %v1447 = vunpack.c.l.b16 %v1408
      %v1448 = vunpack.c.l.b16 %v1409
      %v1449 = vunpack.c.l.b16 %v1410
      %v1450 = vunpack.c.l.b16 %v1411
      %v1451 = vunpack.c.l.b16 %v1412
      %v1452 = vunpack.c.l.b16 %v1413
      %v1453 = vunpack.c.l.b16 %v1414
      %v1454 = vunpack.c.l.b16 %v1415
      %v1455 = vunpack.c.l.b16 %v1416
      %v1456 = vunpack.c.l.b16 %v1417
      %v1457 = vpack.c.b16 %v1442, %v1441
      %v1458 = vpack.c.b16 %v1444, %v1443
      %v1459 = vpack.c.b16 %v1446, %v1445
      %v1460 = vpack.c.b16 %v1448, %v1447
      %v1461 = vpack.c.b16 %v1450, %v1449
      %v1462 = vpack.c.b16 %v1452, %v1451
      %v1463 = vpack.c.b16 %v1454, %v1453
      %v1464 = vpack.c.b16 %v1456, %v1455
      %1473 = vmatprep.subr.bf16.mxu0 0
      %1474 = vmatpush1.bf16.msra.mxu0 %v1457
      %1475 = vmatprep.subr.bf16.mxu0 0
      %1476 = vmatpush1.bf16.msra.mxu0 %v1458
      %1477 = vmatprep.subr.bf16.mxu0 0
      %1478 = vmatpush1.bf16.msra.mxu0 %v1459
      %1479 = vmatprep.subr.bf16.mxu0 0
      %1480 = vmatpush1.bf16.msra.mxu0 %v1460
      %1481 = vmatprep.subr.bf16.mxu0 0
      %1482 = vmatpush1.bf16.msra.mxu0 %v1461
      %1483 = vmatprep.subr.bf16.mxu0 0
      %1484 = vmatpush1.bf16.msra.mxu0 %v1462
      %1485 = vmatprep.subr.bf16.mxu0 0
      %1486 = vmatpush1.bf16.msra.mxu0 %v1463
      %1487 = vmatprep.subr.bf16.mxu0 0
      %1488 = vmatpush1.bf16.msra.mxu0 %v1464
      %1489 = vmatprep.subr.bf16.mxu0 0
      %1490 = vmatpush1.bf16.msra.mxu0 0
      %1491 = vmatprep.subr.bf16.mxu0 0
      %1492 = vmatpush1.bf16.msra.mxu0 0
      %1493 = vmatprep.subr.bf16.mxu0 0
      %1494 = vmatpush1.bf16.msra.mxu0 0
      %1495 = vmatprep.subr.bf16.mxu0 0
      %1496 = vmatpush1.bf16.msra.mxu0 0
      %1497 = vmatprep.subr.bf16.mxu0 0
      %1498 = vmatpush1.bf16.msra.mxu0 0
      %1499 = vmatprep.subr.bf16.mxu0 0
      %1500 = vmatpush1.bf16.msra.mxu0 0
      %1501 = vmatprep.subr.bf16.mxu0 0
      %1502 = vmatpush1.bf16.msra.mxu0 0
      %1503 = vmatprep.subr.bf16.mxu0 0
      %1504 = vmatpush1.bf16.msra.mxu0 0
      %1505 = vmatprep.mubr.bf16.mxu0 0
      %1506 = vmatmul.mubr.bf16.gmra.mrb[0].mxu0 %v1394
      %v1507 = vpop.f32.mrb[0].mxu0
      %v1508 = vadd.f32 %v1423, %v1507
      %v1509 = vpop.f32.mrb[0].mxu0
      %v1510 = vpop.f32.mrb[0].mxu0
      %v1511 = vadd.f32 %v1423, %v1510
      %v1512 = vpop.f32.mrb[0].mxu0
      %1513 = vmatprep.mubr.bf16.mxu0 0
      %1514 = vmatmul.mubr.bf16.gmra.mrb[0].mxu0 %v1395
      %v1515 = vpop.f32.mrb[0].mxu0
      %v1516 = vadd.f32 %v1423, %v1515
      %v1517 = vpop.f32.mrb[0].mxu0
      %v1518 = vpop.f32.mrb[0].mxu0
      %v1519 = vadd.f32 %v1423, %v1518
      %v1520 = vpop.f32.mrb[0].mxu0
      %1521 = vmatprep.mubr.bf16.mxu0 0
      %1522 = vmatmul.mubr.bf16.gmra.mrb[0].mxu0 %v1396
      %v1523 = vpop.f32.mrb[0].mxu0
      %v1524 = vadd.f32 %v1423, %v1523
      %v1525 = vpop.f32.mrb[0].mxu0
      %v1526 = vpop.f32.mrb[0].mxu0
      %v1527 = vadd.f32 %v1423, %v1526
      %v1528 = vpop.f32.mrb[0].mxu0
      %1529 = vmatprep.mubr.bf16.mxu0 0
      %1530 = vmatmul.mubr.bf16.gmra.mrb[0].mxu0 %v1397
      %v1531 = vpop.f32.mrb[0].mxu0
      %v1532 = vadd.f32 %v1423, %v1531
      %v1533 = vpop.f32.mrb[0].mxu0
      %v1534 = vpop.f32.mrb[0].mxu0
      %v1535 = vadd.f32 %v1423, %v1534
      %v1536 = vpop.f32.mrb[0].mxu0
      %1537 = vmatprep.mubr.bf16.mxu0 0
      %1538 = vmatmul.mubr.bf16.gmra.mrb[0].mxu0 %v1398
      %v1539 = vpop.f32.mrb[0].mxu0
      %v1540 = vadd.f32 %v1423, %v1539
      %v1541 = vpop.f32.mrb[0].mxu0
      %v1542 = vpop.f32.mrb[0].mxu0
      %v1543 = vadd.f32 %v1423, %v1542
      %v1544 = vpop.f32.mrb[0].mxu0
      %1545 = vmatprep.mubr.bf16.mxu0 0
      %1546 = vmatmul.mubr.bf16.gmra.mrb[0].mxu0 %v1399
      %v1547 = vpop.f32.mrb[0].mxu0
      %v1548 = vadd.f32 %v1423, %v1547
      %v1549 = vpop.f32.mrb[0].mxu0
      %v1550 = vpop.f32.mrb[0].mxu0
      %v1551 = vadd.f32 %v1423, %v1550
      %v1552 = vpop.f32.mrb[0].mxu0
      %1553 = vmatprep.mubr.bf16.mxu0 0
      %1554 = vmatmul.mubr.bf16.gmra.mrb[0].mxu0 %v1400
      %v1555 = vpop.f32.mrb[0].mxu0
      %v1556 = vadd.f32 %v1423, %v1555
      %v1557 = vpop.f32.mrb[0].mxu0
      %v1558 = vpop.f32.mrb[0].mxu0
      %v1559 = vadd.f32 %v1423, %v1558
      %v1560 = vpop.f32.mrb[0].mxu0
      %1561 = vmatprep.mubr.bf16.mxu0 0
      %1562 = vmatmul.mubr.bf16.gmra.mrb[0].mxu0 %v1401
      %v1563 = vpop.f32.mrb[0].mxu0
      %v1564 = vadd.f32 %v1423, %v1563
      %v1565 = vpop.f32.mrb[0].mxu0
      %v1566 = vpop.f32.mrb[0].mxu0
      %v1567 = vadd.f32 %v1423, %v1566
      %v1568 = vpop.f32.mrb[0].mxu0
      %1569 = vdwg.mxu0
      %v1570 = vadd.f32 %v1508, %v813
      %v1571 = vadd.f32 %v1511, %v814
      %v1572 = vadd.f32 %v1516, %v815
      %v1573 = vadd.f32 %v1519, %v816
      %v1574 = vadd.f32 %v1524, %v817
      %v1575 = vadd.f32 %v1527, %v818
      %v1576 = vadd.f32 %v1532, %v819
      %v1577 = vadd.f32 %v1535, %v820
      %v1578 = vadd.f32 %v1540, %v821
      %v1579 = vadd.f32 %v1543, %v822
      %v1580 = vadd.f32 %v1548, %v823
      %v1581 = vadd.f32 %v1551, %v824
      %v1582 = vadd.f32 %v1556, %v825
      %v1583 = vadd.f32 %v1559, %v826
      %v1584 = vadd.f32 %v1564, %v827
      %v1585 = vadd.f32 %v1567, %v828
      %1586 = vst.msk [vmem:[%s300] sm:$0xff] %vm845, %v1570
      %1587 = vst.msk [vmem:[%s300 + $0x8] sm:$0xff] %vm845, %v1571
      %1588 = vst.msk [vmem:[%s300 + $0x10] sm:$0xff] %vm845, %v1572
      %1589 = vst.msk [vmem:[%s300 + $0x18] sm:$0xff] %vm845, %v1573
      %1590 = vst.msk [vmem:[%s300 + $0x20] sm:$0xff] %vm845, %v1574
      %1591 = vst.msk [vmem:[%s300 + $0x28] sm:$0xff] %vm845, %v1575
      %1592 = vst.msk [vmem:[%s300 + $0x30] sm:$0xff] %vm845, %v1576
      %1593 = vst.msk [vmem:[%s300 + $0x38] sm:$0xff] %vm845, %v1577
      %1594 = vst.msk [vmem:[%s300 + $0x40] sm:$0xff] %vm845, %v1578
      %1595 = vst.msk [vmem:[%s300 + $0x48] sm:$0xff] %vm845, %v1579
      %1596 = vst.msk [vmem:[%s300 + $0x50] sm:$0xff] %vm845, %v1580
      %1597 = vst.msk [vmem:[%s300 + $0x58] sm:$0xff] %vm845, %v1581
      %1598 = vst.msk [vmem:[%s300 + $0x60] sm:$0xff] %vm845, %v1582
      %1599 = vst.msk [vmem:[%s300 + $0x68] sm:$0xff] %vm845, %v1583
      %1600 = vst.msk [vmem:[%s300 + $0x70] sm:$0xff] %vm845, %v1584
      %1601 = vst.msk [vmem:[%s300 + $0x78] sm:$0xff] %vm845, %v1585
      %s1602 = smul.u32 16, %s23
      %p1603 = scmp.lt.s32.totalorder %s22, 1
      %s1604 = scalar_select %p1603, %s22, 1
      %p1605 = scmp.lt.s32.totalorder %s1602, 31
      %s1606 = scalar_select %p1605, %s1602, 31
      %s1607 = smul.addr %s1604, 32
      %s1608 = sadd.s32 %s1606, %s1607
      %s1609 = smul.addr %s1608, 8
      %s1610 = scalar_lea.vmem %s7, %s1609
      // Predicated region
      $region53: #{nonlocal_block.1} parent=47 // pred_check
        %p1611 = pneg %p202
      $region54: #{nonlocal_block.1} parent=47 // pred_check_branch
        %1613 = sbr.rel (%p1611) target = $region56
      $region55: #{nonlocal_block.1} parent=47 // pred_region
        %s1614 = smul.u32 16, %s23
      $region56: #{nonlocal_block.1} parent=47 // pred_fallthru
        _
    $region48: #{nonlocal_block.1} parent=5 // pred_fallthru
      _
    %p1615 = scmp.le.s32.totalorder 2, %s13
    // Predicated region
    $region57: #{nonlocal_block.1} parent=5 // pred_check
      %p1616 = pneg %p1615
    $region58: #{nonlocal_block.1} parent=5 // pred_check_branch
      %1618 = sbr.rel (%p1616) target = $region60
    $region59: #{nonlocal_block.1} parent=5 // pred_region
      %s1619 = ssub.s32 %s13, 2
      // Predicated region
      $region61: #{nonlocal_block.1} parent=59 // pred_check
        %p1620 = pneg %p208
      $region62: #{nonlocal_block.1} parent=59 // pred_check_branch
        %1622 = sbr.rel (%p1620) target = $region64
      $region63: #{nonlocal_block.1} parent=59 // pred_region
        %s1623 = smul.u32 16, %s25
        %p1624 = scmp.lt.s32.totalorder %s24, 1
        %s1625 = scalar_select %p1624, %s24, 1
        %p1626 = scmp.lt.s32.totalorder %s1623, 31
        %s1627 = scalar_select %p1626, %s1623, 31
        %s1628 = smul.addr %s1625, 32
        %s1629 = sadd.s32 %s1627, %s1628
        %s1630 = smul.addr %s1629, 8
        %s1631 = scalar_lea.vmem %s7, %s1630
      $region64: #{nonlocal_block.1} parent=59 // pred_fallthru
        _
    $region60: #{nonlocal_block.1} parent=5 // pred_fallthru
      _
  $region6: #{nonlocal_block.1} parent=0 // loop_footer
    %s17 = sadd.s32 1, %s13
  $region7: #{nonlocal_block.1} parent=0 // loop_footer_branch
    %12 = sbr.rel target = $region3
  $region8: #{nonlocal_block.1} parent=0 // loop_exit
    _

</llo_original>
